<compile_context>
chip_gen: v7x
topology: tpu7x:2x2x1
jax: 0.10.0
libtpu: 0.0.40
codegen_flags: <defaults>
</compile_context>

<pallas_src>
import functools

import jax
import jax.numpy as jnp
import numpy as np
from jax.experimental import pallas as pl
from jax.experimental.pallas import tpu as pltpu


# ---------------------------------------------------------------------------
# Generation-aware sizing helpers
# ---------------------------------------------------------------------------
def _chip_profile():
    """Best-effort VMEM budget / parallel-core count per TPU generation."""
    kind = ""
    try:
        kind = jax.devices()[0].device_kind.lower()
    except Exception:
        pass
    if "v7" in kind:
        # v7x: 64 MiB VMEM per TensorCore, 2 TCs share the "parallel" axis.
        return {"vmem_limit": 48 * 2**20, "vmem_budget": 40 * 2**20,
                "parallel_cores": 2}
    if "v5" in kind or "v6" in kind:
        # v5e / v6e: single TensorCore, 128 MiB physical VMEM -> big tiles.
        return {"vmem_limit": 80 * 2**20, "vmem_budget": 64 * 2**20,
                "parallel_cores": 1}
    # Unknown chip: leave the compiler's default scoped-VMEM limit alone and
    # size tiles conservatively.
    return {"vmem_limit": None, "vmem_budget": 16 * 2**20, "parallel_cores": 2}


def _per_item_vmem_bytes(seq_len, fv, fk, heads, fv_o, fk_o, f_pad, md_bytes):
    """Rough VMEM bytes needed per batch element of one grid step."""
    s = seq_len
    stream_in = 2 * md_bytes * s * (fv + 2 * fk)          # double-buffered inputs
    stream_out = 2 * 4 * s * f_pad                        # double-buffered f32 out
    proj_f32 = 4 * s * heads * (fv_o + 2 * fk_o)          # f32 projections
    proj_md = md_bytes * s * heads * (fv_o + 2 * fk_o)    # head-major bf16 copies
    scores = 2 * 4 * heads * s * s                        # f32 scores + probs
    ctx = 4 * s * heads * fv_o + 4 * s * f_pad
    return int(1.5 * (stream_in + stream_out + proj_f32 + proj_md + scores + ctx))


def _pick_block_batch(batch, per_item_bytes, budget, parallel_cores):
    """Largest divisor of `batch` fitting the VMEM budget; on multi-TC chips
    prefer step counts that keep every TensorCore busy."""
    cap = max(1, budget // max(per_item_bytes, 1))
    divisors = [d for d in range(1, batch + 1) if batch % d == 0]
    fits = [d for d in divisors if d <= cap] or [1]
    if parallel_cores > 1:
        even = [d for d in fits if (batch // d) % parallel_cores == 0]
        if even:
            return max(even)
    return max(fits)


# ---------------------------------------------------------------------------
# Kernel
# ---------------------------------------------------------------------------
def _attention_kernel(v_ref, k_ref, q_ref,
                      wv_ref, bv_ref, wk_ref, bk_ref, wq_ref, bq_ref,
                      wo_ref, bo_ref, o_ref,
                      *, heads, block_batch, fv_o, fk_o, matmul_dtype):
    f32 = jnp.float32
    md = matmul_dtype
    bt, H = block_batch, heads
    S = v_ref.shape[1]
    F_pad = o_ref.shape[2]

    def project(x_ref, w_ref, b_ref):
        # One large un-batched MXU matmul per projection (bf16 in, f32 acc).
        x2 = x_ref[...].reshape(bt * S, x_ref.shape[2])            # (bt*S, F_in)
        y = jnp.dot(x2, w_ref[...], preferred_element_type=f32)    # (bt*S, H*d)
        return y + b_ref[...]                                      # bias in f32

    v2 = project(v_ref, wv_ref, bv_ref)        # (bt*S, H*Fv_o) f32
    k2 = project(k_ref, wk_ref, bk_ref)        # (bt*S, H*Fk_o) f32
    q2 = project(q_ref, wq_ref, bq_ref)        # 1/sqrt(Fk_o) pre-folded in Wq/bq

    def to_heads(y2, d):
        # (bt*S, H*d) -> (H*bt, S, d) via static lane slices; head h of batch b
        # lands at batch index h*bt + b.  No broadcasts, no 4-D transposes.
        cols = [y2[:, h * d:(h + 1) * d] for h in range(H)]
        return jnp.stack(cols, axis=0).reshape(H * bt, S, d)

    v = to_heads(v2.astype(md), fv_o)          # (H*bt, S, Fv_o) bf16
    k = to_heads(k2.astype(md), fk_o)          # (H*bt, S, Fk_o) bf16
    q = to_heads(q2.astype(md), fk_o)

    # Scores / softmax / context: inherently batched over (head, batch) pairs.
    s = jnp.einsum('bqd,bkd->bqk', q, k, preferred_element_type=f32)
    s = s - jnp.max(s, axis=-1, keepdims=True)
    p = jnp.exp(s)
    p = p * pl.reciprocal(jnp.sum(p, axis=-1, keepdims=True), approx=True)

    ctx = jnp.einsum('bqk,bkd->bqd', p.astype(md), v,
                     preferred_element_type=f32)                   # (H*bt, S, Fv_o)

    # Final linear: concat heads back onto the feature axis and run ONE deep
    # matmul against the original 2-D Wo (contraction depth K = H*Fv_o).
    ctx_h = ctx.reshape(H, bt * S, fv_o)
    ctx2 = jnp.concatenate([ctx_h[h] for h in range(H)], axis=-1)  # (bt*S, H*Fv_o)
    out = jnp.dot(ctx2.astype(md), wo_ref[...], preferred_element_type=f32)
    out = out + bo_ref[...]                                        # (bt*S, F_pad)
    o_ref[...] = out.reshape(bt, S, F_pad).astype(o_ref.dtype)


# ---------------------------------------------------------------------------
# Wrapper
# ---------------------------------------------------------------------------
def new_attention(V, K, Q, params, *, heads, fv_o, fk_o, f_out,
                  block_batch=None, matmul_dtype=jnp.bfloat16):
    """Pallas implementation of NewAttention.forward (mask=None)."""
    batch, seq_len, fv = V.shape
    _, _, fk = K.shape
    wv, bv, wk, bk, wq, bq, wo, bo = params
    f32 = jnp.float32
    md = matmul_dtype
    md_bytes = jnp.dtype(md).itemsize

    # ---- parameter prep (plain XLA outside the kernel; free at runtime) ----
    scale = 1.0 / float(np.sqrt(fk_o))                 # fold score scale into Q proj
    wq_s, bq_s = wq * scale, bq * scale

    # Lane-dense output padding only when it does not blow up writeback bytes.
    f_pad = ((f_out + 127) // 128) * 128
    if f_pad > 2 * f_out:
        f_pad = f_out
    if f_pad != f_out:
        wo_p = jnp.pad(wo, ((0, 0), (0, f_pad - f_out)))
        bo_p = jnp.pad(bo, ((0, 0), (0, f_pad - f_out)))
    else:
        wo_p, bo_p = wo, bo

    # Pre-cast matmul operands to bf16 once in the wrapper; biases stay f32.
    Vc, Kc, Qc = V.astype(md), K.astype(md), Q.astype(md)
    wv_c, wk_c, wq_c, wo_c = (w.astype(md) for w in (wv, wk, wq_s, wo_p))
    bv_c, bk_c, bq_c, bo_c = (b.astype(f32) for b in (bv, bk, bq_s, bo_p))

    # ---- generation-aware batch tile ----------------------------------------
    profile = _chip_profile()
    per_item = _per_item_vmem_bytes(seq_len, fv, fk, heads, fv_o, fk_o, f_pad,
                                    md_bytes)
    weight_bytes = (2 * md_bytes * (wv_c.size + wk_c.size + wq_c.size + wo_c.size)
                    + 2 * 4 * (bv_c.size + bk_c.size + bq_c.size + bo_c.size))
    budget = max(profile["vmem_budget"] - weight_bytes, per_item)
    bt = (_pick_block_batch(batch, per_item, budget, profile["parallel_cores"])
          if block_batch is None else block_batch)
    assert batch % bt == 0, "block_batch must divide batch"

    kernel = functools.partial(_attention_kernel, heads=heads, block_batch=bt,
                               fv_o=fv_o, fk_o=fk_o, matmul_dtype=md)

    def const_spec(shape):
        # Constant-index full-array block: fetched once, reused every step.
        return pl.BlockSpec(shape, lambda b: (0,) * len(shape))

    grid_spec = pltpu.PrefetchScalarGridSpec(
        num_scalar_prefetch=0,
        grid=(batch // bt,),
        in_specs=[
            pl.BlockSpec((bt, seq_len, fv), lambda b: (b, 0, 0)),   # V (bf16)
            pl.BlockSpec((bt, seq_len, fk), lambda b: (b, 0, 0)),   # K (bf16)
            pl.BlockSpec((bt, seq_len, fk), lambda b: (b, 0, 0)),   # Q (bf16)
            const_spec(wv_c.shape), const_spec(bv_c.shape),
            const_spec(wk_c.shape), const_spec(bk_c.shape),
            const_spec(wq_c.shape), const_spec(bq_c.shape),
            const_spec(wo_c.shape), const_spec(bo_c.shape),
        ],
        out_specs=pl.BlockSpec((bt, seq_len, f_pad), lambda b: (b, 0, 0)),
    )

    # Advisory scheduling hint for XLA around the custom call.
    flops = (2 * batch * seq_len * (fv * heads * fv_o + 2 * fk * heads * fk_o)
             + 2 * batch * heads * seq_len * seq_len * (fk_o + fv_o)
             + 2 * batch * seq_len * heads * fv_o * f_pad)
    bytes_accessed = (md_bytes * (Vc.size + Kc.size + Qc.size)
                      + md_bytes * (wv_c.size + wk_c.size + wq_c.size + wo_c.size)
                      + 4 * (bv_c.size + bk_c.size + bq_c.size + bo_c.size)
                      + 4 * batch * seq_len * f_pad)
    cost = pl.CostEstimate(flops=int(flops),
                           transcendentals=int(batch * heads * seq_len * seq_len),
                           bytes_accessed=int(bytes_accessed))

    cp_kwargs = dict(dimension_semantics=("parallel",))
    if profile["vmem_limit"] is not None:
        cp_kwargs["vmem_limit_bytes"] = int(profile["vmem_limit"])

    out = pl.pallas_call(
        kernel,
        out_shape=jax.ShapeDtypeStruct((batch, seq_len, f_pad), f32),
        grid_spec=grid_spec,
        compiler_params=pltpu.CompilerParams(**cp_kwargs),
        cost_estimate=cost,
    )(Vc, Kc, Qc, wv_c, bv_c, wk_c, bk_c, wq_c, bq_c, wo_c, bo_c)

    return out[..., :f_out] if f_pad != f_out else out


# ---------------------------------------------------------------------------
# Pure-JAX (f32) reference mirroring the PyTorch forward exactly
# ---------------------------------------------------------------------------
def reference_new_attention(V, K, Q, params, *, heads, fv_o, fk_o):
    wv, bv, wk, bk, wq, bq, wo, bo = params
    batch, seq_len, _ = V.shape
    v = V @ wv + bv[0]
    k = K @ wk + bk[0]
    q = Q @ wq + bq[0]
    v = v.reshape(batch, seq_len, heads, fv_o).transpose(0, 2, 1, 3)
    k = k.reshape(batch, seq_len, heads, fk_o).transpose(0, 2, 1, 3)
    q = q.reshape(batch, seq_len, heads, fk_o).transpose(0, 2, 1, 3)
    scores = jnp.einsum("bhqd,bhkd->bhqk", q, k) / jnp.sqrt(jnp.float32(fk_o))
    p = jax.nn.softmax(scores, axis=-1)
    ctx = jnp.einsum("bhqk,bhkd->bhqd", p, v)
    ctx = ctx.transpose(0, 2, 1, 3).reshape(batch, seq_len, heads * fv_o)
    return ctx @ wo + bo[0]


if __name__ == "__main__":
    # Small, deterministic configuration consistent with the module.
    batch, seq_len = 2, 8
    Fv, Fk = 16, 16          # input feature dims for V and K/Q
    Fv_o, Fk_o = 8, 8        # per-head dims
    heads = 4
    F_out = 16

    key = jax.random.PRNGKey(0)
    keys = jax.random.split(key, 12)

    V = jax.random.normal(keys[0], (batch, seq_len, Fv), jnp.float32)
    K = jax.random.normal(keys[1], (batch, seq_len, Fk), jnp.float32)
    Q = jax.random.normal(keys[2], (batch, seq_len, Fk), jnp.float32)

    # Deterministic parameter init (weights stored as (in, out)).
    wv = jax.random.normal(keys[3], (Fv, heads * Fv_o), jnp.float32) * 0.1
    bv = jax.random.normal(keys[4], (1, heads * Fv_o), jnp.float32) * 0.1
    wk = jax.random.normal(keys[5], (Fk, heads * Fk_o), jnp.float32) * 0.1
    bk = jax.random.normal(keys[6], (1, heads * Fk_o), jnp.float32) * 0.1
    wq = jax.random.normal(keys[7], (Fk, heads * Fk_o), jnp.float32) * 0.1
    bq = jax.random.normal(keys[8], (1, heads * Fk_o), jnp.float32) * 0.1
    wo = jax.random.normal(keys[9], (heads * Fv_o, F_out), jnp.float32) * 0.1
    bo = jax.random.normal(keys[10], (1, F_out), jnp.float32) * 0.1
    params = (wv, bv, wk, bk, wq, bq, wo, bo)

    out = new_attention(V, K, Q, params, heads=heads, fv_o=Fv_o, fk_o=Fk_o,
                        f_out=F_out)
    out = jax.block_until_ready(out)

    ref = reference_new_attention(V, K, Q, params, heads=heads, fv_o=Fv_o,
                                  fk_o=Fk_o)
    # bf16 MXU operands (f32 accumulation) + approx reciprocal vs. an all-f32
    # reference: compare at bf16-level tolerance.
    np.testing.assert_allclose(np.asarray(out), np.asarray(ref),
                               rtol=2e-2, atol=2e-2)

    print("KERNEL_OK")
</pallas_src>

<mosaic_0001>
module attributes {stable_mosaic.version = 11 : i64} {
  func.func @_attention_kernel(%arg0: i32, %arg1: memref<1x8x16xbf16, #tpu.memory_space<vmem>>, %arg2: memref<1x8x16xbf16, #tpu.memory_space<vmem>>, %arg3: memref<1x8x16xbf16, #tpu.memory_space<vmem>>, %arg4: memref<16x32xbf16, #tpu.memory_space<vmem>>, %arg5: memref<1x32xf32, #tpu.memory_space<vmem>>, %arg6: memref<16x32xbf16, #tpu.memory_space<vmem>>, %arg7: memref<1x32xf32, #tpu.memory_space<vmem>>, %arg8: memref<16x32xbf16, #tpu.memory_space<vmem>>, %arg9: memref<1x32xf32, #tpu.memory_space<vmem>>, %arg10: memref<32x16xbf16, #tpu.memory_space<vmem>>, %arg11: memref<1x16xf32, #tpu.memory_space<vmem>>, %arg12: memref<1x8x16xf32, #tpu.memory_space<vmem>>) attributes {dimension_semantics = [#tpu.dimension_semantics<parallel>], iteration_bounds = array<i64: 2>, scalar_prefetch = 0 : i64, scratch_operands = 0 : i64, tpu.core_type = #tpu.core_type<tc>, window_params = [{transform_indices = @transform_0, window_bounds = array<i64: 1, 8, 16>}, {transform_indices = @transform_1, window_bounds = array<i64: 1, 8, 16>}, {transform_indices = @transform_2, window_bounds = array<i64: 1, 8, 16>}, {pipeline_mode = #tpu.pipeline_mode<synchronous>, transform_indices = @transform_3, window_bounds = array<i64: 16, 32>}, {pipeline_mode = #tpu.pipeline_mode<synchronous>, transform_indices = @transform_4, window_bounds = array<i64: 1, 32>}, {pipeline_mode = #tpu.pipeline_mode<synchronous>, transform_indices = @transform_5, window_bounds = array<i64: 16, 32>}, {pipeline_mode = #tpu.pipeline_mode<synchronous>, transform_indices = @transform_6, window_bounds = array<i64: 1, 32>}, {pipeline_mode = #tpu.pipeline_mode<synchronous>, transform_indices = @transform_7, window_bounds = array<i64: 16, 32>}, {pipeline_mode = #tpu.pipeline_mode<synchronous>, transform_indices = @transform_8, window_bounds = array<i64: 1, 32>}, {pipeline_mode = #tpu.pipeline_mode<synchronous>, transform_indices = @transform_9, window_bounds = array<i64: 32, 16>}, {pipeline_mode = #tpu.pipeline_mode<synchronous>, transform_indices = @transform_10, window_bounds = array<i64: 1, 16>}, {transform_indices = @transform_11, window_bounds = array<i64: 1, 8, 16>}]} {
    %c0 = arith.constant 0 : index
    %c0_0 = arith.constant 0 : index
    %c0_1 = arith.constant 0 : index
    %0 = vector.load %arg1[%c0, %c0_0, %c0_1] : memref<1x8x16xbf16, #tpu.memory_space<vmem>>, vector<1x8x16xbf16>
    %1 = vector.shape_cast %0 : vector<1x8x16xbf16> to vector<8x16xbf16>
    %c0_2 = arith.constant 0 : index
    %c0_3 = arith.constant 0 : index
    %2 = vector.load %arg4[%c0_2, %c0_3] : memref<16x32xbf16, #tpu.memory_space<vmem>>, vector<16x32xbf16>
    %cst = arith.constant dense<0.000000e+00> : vector<8x32xf32>
    %3 = tpu.matmul %1, %2, %cst {dimension_numbers = #tpu.dot_dimension_numbers<[1], [0], [0], [1], [0, 0, 1, 1], [], []>} : vector<8x16xbf16>, vector<16x32xbf16>, vector<8x32xf32> -> vector<8x32xf32>
    %c0_4 = arith.constant 0 : index
    %c0_5 = arith.constant 0 : index
    %4 = vector.load %arg5[%c0_4, %c0_5] : memref<1x32xf32, #tpu.memory_space<vmem>>, vector<1x32xf32>
    %5 = vector.broadcast %4 : vector<1x32xf32> to vector<8x32xf32>
    %6 = arith.addf %3, %5 : vector<8x32xf32>
    %c0_6 = arith.constant 0 : index
    %c0_7 = arith.constant 0 : index
    %c0_8 = arith.constant 0 : index
    %7 = vector.load %arg2[%c0_6, %c0_7, %c0_8] : memref<1x8x16xbf16, #tpu.memory_space<vmem>>, vector<1x8x16xbf16>
    %8 = vector.shape_cast %7 : vector<1x8x16xbf16> to vector<8x16xbf16>
    %c0_9 = arith.constant 0 : index
    %c0_10 = arith.constant 0 : index
    %9 = vector.load %arg6[%c0_9, %c0_10] : memref<16x32xbf16, #tpu.memory_space<vmem>>, vector<16x32xbf16>
    %cst_11 = arith.constant dense<0.000000e+00> : vector<8x32xf32>
    %10 = tpu.matmul %8, %9, %cst_11 {dimension_numbers = #tpu.dot_dimension_numbers<[1], [0], [0], [1], [0, 0, 1, 1], [], []>} : vector<8x16xbf16>, vector<16x32xbf16>, vector<8x32xf32> -> vector<8x32xf32>
    %c0_12 = arith.constant 0 : index
    %c0_13 = arith.constant 0 : index
    %11 = vector.load %arg7[%c0_12, %c0_13] : memref<1x32xf32, #tpu.memory_space<vmem>>, vector<1x32xf32>
    %12 = vector.broadcast %11 : vector<1x32xf32> to vector<8x32xf32>
    %13 = arith.addf %10, %12 : vector<8x32xf32>
    %c0_14 = arith.constant 0 : index
    %c0_15 = arith.constant 0 : index
    %c0_16 = arith.constant 0 : index
    %14 = vector.load %arg3[%c0_14, %c0_15, %c0_16] : memref<1x8x16xbf16, #tpu.memory_space<vmem>>, vector<1x8x16xbf16>
    %15 = vector.shape_cast %14 : vector<1x8x16xbf16> to vector<8x16xbf16>
    %c0_17 = arith.constant 0 : index
    %c0_18 = arith.constant 0 : index
    %16 = vector.load %arg8[%c0_17, %c0_18] : memref<16x32xbf16, #tpu.memory_space<vmem>>, vector<16x32xbf16>
    %cst_19 = arith.constant dense<0.000000e+00> : vector<8x32xf32>
    %17 = tpu.matmul %15, %16, %cst_19 {dimension_numbers = #tpu.dot_dimension_numbers<[1], [0], [0], [1], [0, 0, 1, 1], [], []>} : vector<8x16xbf16>, vector<16x32xbf16>, vector<8x32xf32> -> vector<8x32xf32>
    %c0_20 = arith.constant 0 : index
    %c0_21 = arith.constant 0 : index
    %18 = vector.load %arg9[%c0_20, %c0_21] : memref<1x32xf32, #tpu.memory_space<vmem>>, vector<1x32xf32>
    %19 = vector.broadcast %18 : vector<1x32xf32> to vector<8x32xf32>
    %20 = arith.addf %17, %19 : vector<8x32xf32>
    %21 = arith.truncf %6 : vector<8x32xf32> to vector<8x32xbf16>
    %22 = vector.extract_strided_slice %21 {offsets = [0, 0], sizes = [8, 8], strides = [1, 1]} : vector<8x32xbf16> to vector<8x8xbf16>
    %23 = vector.extract_strided_slice %21 {offsets = [0, 8], sizes = [8, 8], strides = [1, 1]} : vector<8x32xbf16> to vector<8x8xbf16>
    %24 = vector.extract_strided_slice %21 {offsets = [0, 16], sizes = [8, 8], strides = [1, 1]} : vector<8x32xbf16> to vector<8x8xbf16>
    %25 = vector.extract_strided_slice %21 {offsets = [0, 24], sizes = [8, 8], strides = [1, 1]} : vector<8x32xbf16> to vector<8x8xbf16>
    %26 = vector.shape_cast %22 : vector<8x8xbf16> to vector<1x8x8xbf16>
    %27 = vector.shape_cast %23 : vector<8x8xbf16> to vector<1x8x8xbf16>
    %28 = vector.shape_cast %24 : vector<8x8xbf16> to vector<1x8x8xbf16>
    %29 = vector.shape_cast %25 : vector<8x8xbf16> to vector<1x8x8xbf16>
    %30 = tpu.concatenate %26, %27, %28, %29 in 0 : vector<1x8x8xbf16>, vector<1x8x8xbf16>, vector<1x8x8xbf16>, vector<1x8x8xbf16> -> vector<4x8x8xbf16>
    %31 = arith.truncf %13 : vector<8x32xf32> to vector<8x32xbf16>
    %32 = vector.extract_strided_slice %31 {offsets = [0, 0], sizes = [8, 8], strides = [1, 1]} : vector<8x32xbf16> to vector<8x8xbf16>
    %33 = vector.extract_strided_slice %31 {offsets = [0, 8], sizes = [8, 8], strides = [1, 1]} : vector<8x32xbf16> to vector<8x8xbf16>
    %34 = vector.extract_strided_slice %31 {offsets = [0, 16], sizes = [8, 8], strides = [1, 1]} : vector<8x32xbf16> to vector<8x8xbf16>
    %35 = vector.extract_strided_slice %31 {offsets = [0, 24], sizes = [8, 8], strides = [1, 1]} : vector<8x32xbf16> to vector<8x8xbf16>
    %36 = vector.shape_cast %32 : vector<8x8xbf16> to vector<1x8x8xbf16>
    %37 = vector.shape_cast %33 : vector<8x8xbf16> to vector<1x8x8xbf16>
    %38 = vector.shape_cast %34 : vector<8x8xbf16> to vector<1x8x8xbf16>
    %39 = vector.shape_cast %35 : vector<8x8xbf16> to vector<1x8x8xbf16>
    %40 = tpu.concatenate %36, %37, %38, %39 in 0 : vector<1x8x8xbf16>, vector<1x8x8xbf16>, vector<1x8x8xbf16>, vector<1x8x8xbf16> -> vector<4x8x8xbf16>
    %41 = arith.truncf %20 : vector<8x32xf32> to vector<8x32xbf16>
    %42 = vector.extract_strided_slice %41 {offsets = [0, 0], sizes = [8, 8], strides = [1, 1]} : vector<8x32xbf16> to vector<8x8xbf16>
    %43 = vector.extract_strided_slice %41 {offsets = [0, 8], sizes = [8, 8], strides = [1, 1]} : vector<8x32xbf16> to vector<8x8xbf16>
    %44 = vector.extract_strided_slice %41 {offsets = [0, 16], sizes = [8, 8], strides = [1, 1]} : vector<8x32xbf16> to vector<8x8xbf16>
    %45 = vector.extract_strided_slice %41 {offsets = [0, 24], sizes = [8, 8], strides = [1, 1]} : vector<8x32xbf16> to vector<8x8xbf16>
    %46 = vector.shape_cast %42 : vector<8x8xbf16> to vector<1x8x8xbf16>
    %47 = vector.shape_cast %43 : vector<8x8xbf16> to vector<1x8x8xbf16>
    %48 = vector.shape_cast %44 : vector<8x8xbf16> to vector<1x8x8xbf16>
    %49 = vector.shape_cast %45 : vector<8x8xbf16> to vector<1x8x8xbf16>
    %50 = tpu.concatenate %46, %47, %48, %49 in 0 : vector<1x8x8xbf16>, vector<1x8x8xbf16>, vector<1x8x8xbf16>, vector<1x8x8xbf16> -> vector<4x8x8xbf16>
    "tpu.trace_start"() <{level = 10 : i32, message = "bqd,bkd->bqk"}> : () -> ()
    %cst_22 = arith.constant dense<0.000000e+00> : vector<4x8x8xf32>
    %51 = tpu.matmul %50, %40, %cst_22 {dimension_numbers = #tpu.dot_dimension_numbers<[2], [2], [1], [1], [0, 0, 0, 1, 1, 1], [0], [0]>} : vector<4x8x8xbf16>, vector<4x8x8xbf16>, vector<4x8x8xf32> -> vector<4x8x8xf32>
    "tpu.trace_stop"() : () -> ()
    %cst_23 = arith.constant dense<0xFF800000> : vector<4x8xf32>
    %52 = vector.multi_reduction <maximumf>, %51, %cst_23 [2] : vector<4x8x8xf32> to vector<4x8xf32>
    %53 = vector.shape_cast %52 : vector<4x8xf32> to vector<4x8x1xf32>
    %54 = vector.broadcast %53 : vector<4x8x1xf32> to vector<4x8x8xf32>
    %55 = arith.subf %51, %54 : vector<4x8x8xf32>
    %56 = math.exp %55 : vector<4x8x8xf32>
    %cst_24 = arith.constant dense<0.000000e+00> : vector<4x8xf32>
    %57 = vector.multi_reduction <add>, %56, %cst_24 [2] : vector<4x8x8xf32> to vector<4x8xf32>
    %58 = vector.shape_cast %57 : vector<4x8xf32> to vector<4x8x1xf32>
    %59 = tpu.reciprocal %58 {approx = true} : vector<4x8x1xf32> -> vector<4x8x1xf32>
    %60 = vector.broadcast %59 : vector<4x8x1xf32> to vector<4x8x8xf32>
    %61 = arith.mulf %56, %60 : vector<4x8x8xf32>
    %62 = arith.truncf %61 : vector<4x8x8xf32> to vector<4x8x8xbf16>
    "tpu.trace_start"() <{level = 10 : i32, message = "bqk,bkd->bqd"}> : () -> ()
    %cst_25 = arith.constant dense<0.000000e+00> : vector<4x8x8xf32>
    %63 = tpu.matmul %62, %30, %cst_25 {dimension_numbers = #tpu.dot_dimension_numbers<[2], [1], [1], [2], [0, 0, 0, 1, 1, 2], [0], [0]>} : vector<4x8x8xbf16>, vector<4x8x8xbf16>, vector<4x8x8xf32> -> vector<4x8x8xf32>
    "tpu.trace_stop"() : () -> ()
    %64 = vector.extract_strided_slice %63 {offsets = [0, 0, 0], sizes = [1, 8, 8], strides = [1, 1, 1]} : vector<4x8x8xf32> to vector<1x8x8xf32>
    %65 = vector.shape_cast %64 : vector<1x8x8xf32> to vector<8x8xf32>
    %66 = vector.extract_strided_slice %63 {offsets = [1, 0, 0], sizes = [1, 8, 8], strides = [1, 1, 1]} : vector<4x8x8xf32> to vector<1x8x8xf32>
    %67 = vector.shape_cast %66 : vector<1x8x8xf32> to vector<8x8xf32>
    %68 = vector.extract_strided_slice %63 {offsets = [2, 0, 0], sizes = [1, 8, 8], strides = [1, 1, 1]} : vector<4x8x8xf32> to vector<1x8x8xf32>
    %69 = vector.shape_cast %68 : vector<1x8x8xf32> to vector<8x8xf32>
    %70 = vector.extract_strided_slice %63 {offsets = [3, 0, 0], sizes = [1, 8, 8], strides = [1, 1, 1]} : vector<4x8x8xf32> to vector<1x8x8xf32>
    %71 = vector.shape_cast %70 : vector<1x8x8xf32> to vector<8x8xf32>
    %72 = tpu.concatenate %65, %67, %69, %71 in 1 : vector<8x8xf32>, vector<8x8xf32>, vector<8x8xf32>, vector<8x8xf32> -> vector<8x32xf32>
    %73 = arith.truncf %72 : vector<8x32xf32> to vector<8x32xbf16>
    %c0_26 = arith.constant 0 : index
    %c0_27 = arith.constant 0 : index
    %74 = vector.load %arg10[%c0_26, %c0_27] : memref<32x16xbf16, #tpu.memory_space<vmem>>, vector<32x16xbf16>
    %cst_28 = arith.constant dense<0.000000e+00> : vector<8x16xf32>
    %75 = tpu.matmul %73, %74, %cst_28 {dimension_numbers = #tpu.dot_dimension_numbers<[1], [0], [0], [1], [0, 0, 1, 1], [], []>} : vector<8x32xbf16>, vector<32x16xbf16>, vector<8x16xf32> -> vector<8x16xf32>
    %c0_29 = arith.constant 0 : index
    %c0_30 = arith.constant 0 : index
    %76 = vector.load %arg11[%c0_29, %c0_30] : memref<1x16xf32, #tpu.memory_space<vmem>>, vector<1x16xf32>
    %77 = vector.broadcast %76 : vector<1x16xf32> to vector<8x16xf32>
    %78 = arith.addf %75, %77 : vector<8x16xf32>
    %79 = vector.shape_cast %78 : vector<8x16xf32> to vector<1x8x16xf32>
    %c0_31 = arith.constant 0 : index
    %c0_32 = arith.constant 0 : index
    %c0_33 = arith.constant 0 : index
    %80 = vector.load %arg12[%c0_31, %c0_32, %c0_33] : memref<1x8x16xf32, #tpu.memory_space<vmem>>, vector<1x8x16xf32>
    tpu.vector_store %arg12[%c0_31, %c0_32, %c0_33], %79 {strides = array<i32>} : memref<1x8x16xf32, #tpu.memory_space<vmem>>, vector<1x8x16xf32>,
    return
  }
  func.func @transform_0(%arg0: i32) -> (i32, i32, i32) {
    %c0_i32 = arith.constant 0 : i32
    %c0_i32_0 = arith.constant 0 : i32
    %c0_i32_1 = arith.constant 0 : i32
    return %arg0, %c0_i32, %c0_i32_0 : i32, i32, i32
  }
  func.func @transform_1(%arg0: i32) -> (i32, i32, i32) {
    %c0_i32 = arith.constant 0 : i32
    %c0_i32_0 = arith.constant 0 : i32
    %c0_i32_1 = arith.constant 0 : i32
    return %arg0, %c0_i32, %c0_i32_0 : i32, i32, i32
  }
  func.func @transform_2(%arg0: i32) -> (i32, i32, i32) {
    %c0_i32 = arith.constant 0 : i32
    %c0_i32_0 = arith.constant 0 : i32
    %c0_i32_1 = arith.constant 0 : i32
    return %arg0, %c0_i32, %c0_i32_0 : i32, i32, i32
  }
  func.func @transform_3(%arg0: i32) -> (i32, i32) {
    %c0_i32 = arith.constant 0 : i32
    %c0_i32_0 = arith.constant 0 : i32
    %c0_i32_1 = arith.constant 0 : i32
    return %c0_i32, %c0_i32_0 : i32, i32
  }
  func.func @transform_4(%arg0: i32) -> (i32, i32) {
    %c0_i32 = arith.constant 0 : i32
    %c0_i32_0 = arith.constant 0 : i32
    %c0_i32_1 = arith.constant 0 : i32
    return %c0_i32, %c0_i32_0 : i32, i32
  }
  func.func @transform_5(%arg0: i32) -> (i32, i32) {
    %c0_i32 = arith.constant 0 : i32
    %c0_i32_0 = arith.constant 0 : i32
    %c0_i32_1 = arith.constant 0 : i32
    return %c0_i32, %c0_i32_0 : i32, i32
  }
  func.func @transform_6(%arg0: i32) -> (i32, i32) {
    %c0_i32 = arith.constant 0 : i32
    %c0_i32_0 = arith.constant 0 : i32
    %c0_i32_1 = arith.constant 0 : i32
    return %c0_i32, %c0_i32_0 : i32, i32
  }
  func.func @transform_7(%arg0: i32) -> (i32, i32) {
    %c0_i32 = arith.constant 0 : i32
    %c0_i32_0 = arith.constant 0 : i32
    %c0_i32_1 = arith.constant 0 : i32
    return %c0_i32, %c0_i32_0 : i32, i32
  }
  func.func @transform_8(%arg0: i32) -> (i32, i32) {
    %c0_i32 = arith.constant 0 : i32
    %c0_i32_0 = arith.constant 0 : i32
    %c0_i32_1 = arith.constant 0 : i32
    return %c0_i32, %c0_i32_0 : i32, i32
  }
  func.func @transform_9(%arg0: i32) -> (i32, i32) {
    %c0_i32 = arith.constant 0 : i32
    %c0_i32_0 = arith.constant 0 : i32
    %c0_i32_1 = arith.constant 0 : i32
    return %c0_i32, %c0_i32_0 : i32, i32
  }
  func.func @transform_10(%arg0: i32) -> (i32, i32) {
    %c0_i32 = arith.constant 0 : i32
    %c0_i32_0 = arith.constant 0 : i32
    %c0_i32_1 = arith.constant 0 : i32
    return %c0_i32, %c0_i32_0 : i32, i32
  }
  func.func @transform_11(%arg0: i32) -> (i32, i32, i32) {
    %c0_i32 = arith.constant 0 : i32
    %c0_i32_0 = arith.constant 0 : i32
    %c0_i32_1 = arith.constant 0 : i32
    return %arg0, %c0_i32, %c0_i32_0 : i32, i32, i32
  }
}

</mosaic_0001>

<llo_original>
// kernel: tpu_custom_call.1
$region0: #{tpu_custom_call.1}
  #allocation0 [shape = 'u32[]', space=smem, size = 0x4, offset = 0x4, fixed_abs, tag = 'smem constant byte address 0x4 - core index']
  #allocation1 [shape = 'u32[144,128]{1,0:T(1,128)}', space=vmem, size = 0x12000, scoped, tag = 'internal scratch']
  %s0 = inlined_call_operand.vmem [shape: bf16[2,8,16], index: 0, kind: input, shape index: {}]
  %s1 = inlined_call_operand.vmem [shape: bf16[2,8,16], index: 1, kind: input, shape index: {}]
  %s2 = inlined_call_operand.vmem [shape: bf16[2,8,16], index: 2, kind: input, shape index: {}]
  %s3 = inlined_call_operand.hbm [shape: bf16[16,32], index: 3, kind: input, shape index: {}]
  %s4 = inlined_call_operand.vmem [shape: f32[1,32], index: 4, kind: input, shape index: {}]
  %s5 = inlined_call_operand.vmem [shape: bf16[16,32], index: 5, kind: input, shape index: {}]
  %s6 = inlined_call_operand.vmem [shape: f32[1,32], index: 6, kind: input, shape index: {}]
  %s7 = inlined_call_operand.vmem [shape: bf16[16,32], index: 7, kind: input, shape index: {}]
  %s8 = inlined_call_operand.vmem [shape: f32[1,32], index: 8, kind: input, shape index: {}]
  %s9 = inlined_call_operand.vmem [shape: bf16[32,16], index: 9, kind: input, shape index: {}]
  %s10 = inlined_call_operand.vmem [shape: f32[1,16], index: 10, kind: input, shape index: {}]
  %s11 = inlined_call_operand.hbm [shape: f32[2,8,16], index: 11, kind: output, shape index: {}]
  %s12 = sld [smem:[#allocation0]]
  $region81: #{tpu_custom_call.1} parent=0
    _
  %s14 = ssub.s32 1, %s12
  %s15 = scalar_select 0, %s14, %s12
  $region1: #{tpu_custom_call.1} parent=0
    #allocation2 [shape = 'u8[4096]{0}', space=vmem, size = 0x1000, scoped, tag = 'input window, operand 3, single buffered']
    #allocation3 [shape = 's32[2]{0}', space=sflag, size = 0x8, scoped, tag = 'scoped memory for tpu_custom_call.1']
    #allocation4 [shape = 's32[2]{0}', space=sflag, size = 0x8, scoped, tag = 'scoped memory for tpu_custom_call.1']
    #allocation5 [shape = 'u8[8192]{0}', space=vmem, size = 0x2000, scoped, tag = 'output window, operand 0']
    %16 = vsyncpa [#allocation3], 0
    %17 = vsyncpa [#allocation4], 0
    %s18 = scalar_lea.sflag [#allocation4], 1
    %19 = vsyncpa %s18, 0
    loop: start=0, step=1, limit=4
    $region2: #{tpu_custom_call.1} parent=1 // loop_pre_header
      _
    $region3: #{tpu_custom_call.1} parent=1 // loop_header
      %s21 = sphi 0, %s25
      %p22 = scmp.ge.s32.totalorder %s21, 4
      %s31 = sphi 0, %s33
      %s34 = sphi 0, %s31
      %s35 = sphi 0, %s34
      %s51 = sphi 0, %s35
      %s57 = sphi 0, %s59
      %s60 = sphi 0, %s57
      %s61 = sphi 0, %s60
      %s77 = sphi 0, %s61
      %s83 = sphi 0, %s85
      %s86 = sphi 0, %s83
      %s87 = sphi 0, %s86
      %s103 = sphi 0, %s87
      %s107 = sphi 0, %s107
      %s109 = sphi 0, %s107
      %s110 = sphi 0, %s109
      %s124 = sphi 0, %s110
      %s128 = sphi 0, %s128
      %s130 = sphi 0, %s128
      %s131 = sphi 0, %s130
      %s145 = sphi 0, %s131
      %s149 = sphi 0, %s149
      %s151 = sphi 0, %s149
      %s152 = sphi 0, %s151
      %s166 = sphi 0, %s152
      %s170 = sphi 0, %s170
      %s172 = sphi 0, %s170
      %s173 = sphi 0, %s172
      %s187 = sphi 0, %s173
      %s191 = sphi 0, %s191
      %s193 = sphi 0, %s191
      %s194 = sphi 0, %s193
      %s208 = sphi 0, %s194
      %s212 = sphi 0, %s212
      %s214 = sphi 0, %s212
      %s215 = sphi 0, %s214
      %s229 = sphi 0, %s215
      %s233 = sphi 0, %s233
      %s235 = sphi 0, %s233
      %s236 = sphi 0, %s235
      %s250 = sphi 0, %s236
      %s254 = sphi 0, %s254
      %s256 = sphi 0, %s254
      %s257 = sphi 0, %s256
      %s271 = sphi 0, %s257
      %s277 = sphi 0, %s279
      %s280 = sphi 0, %s277
      %s281 = sphi 0, %s280
      %s297 = sphi 0, %s281
    $region4: #{tpu_custom_call.1} parent=1 // loop_header_branch
      %24 = sbr.rel (%p22) target = $region8
    $region5: #{tpu_custom_call.1} parent=1 // loop_body
      %s26 = ssub.s32 %s21, 1
      %s27 = ssub.s32 %s21, 2
      %s28 = sadd.s32 %s21, 1
      %s29 = ssub.s32 %s21, %s28
      %p30 = scmp.eq.s32.totalorder %s29, 0
      %s32 = sadd.s32 %s31, 1
      %s33 = scalar_select %p30, %s31, %s32
      %p36 = pneg %p30
      %p37 = scmp.eq.s32.totalorder %s21, 1
      %p38 = por %p36, %p37
      %p39 = scmp.ne.s32.totalorder %s31, %s34
      %p40 = scmp.eq.s32.totalorder %s21, 0
      %p41 = por %p39, %p40
      %p42 = scmp.ne.s32.totalorder %s31, %s34
      %p43 = scmp.eq.s32.totalorder %s26, 1
      %p44 = por %p42, %p43
      %p45 = scmp.ne.s32.totalorder %s34, %s35
      %p46 = scmp.eq.s32.totalorder %s26, 0
      %p47 = por %p45, %p46
      %p48 = scmp.ne.s32.totalorder %s34, %s35
      %p49 = scmp.eq.s32.totalorder %s27, 1
      %p50 = por %p48, %p49
      %p52 = scmp.ne.s32.totalorder %s35, %s51
      %p53 = scmp.eq.s32.totalorder %s27, 0
      %p54 = por %p52, %p53
      %s55 = ssub.s32 %s21, %s28
      %p56 = scmp.eq.s32.totalorder %s55, 0
      %s58 = sadd.s32 %s57, 1
      %s59 = scalar_select %p56, %s57, %s58
      %p62 = pneg %p56
      %p63 = scmp.eq.s32.totalorder %s21, 1
      %p64 = por %p62, %p63
      %p65 = scmp.ne.s32.totalorder %s57, %s60
      %p66 = scmp.eq.s32.totalorder %s21, 0
      %p67 = por %p65, %p66
      %p68 = scmp.ne.s32.totalorder %s57, %s60
      %p69 = scmp.eq.s32.totalorder %s26, 1
      %p70 = por %p68, %p69
      %p71 = scmp.ne.s32.totalorder %s60, %s61
      %p72 = scmp.eq.s32.totalorder %s26, 0
      %p73 = por %p71, %p72
      %p74 = scmp.ne.s32.totalorder %s60, %s61
      %p75 = scmp.eq.s32.totalorder %s27, 1
      %p76 = por %p74, %p75
      %p78 = scmp.ne.s32.totalorder %s61, %s77
      %p79 = scmp.eq.s32.totalorder %s27, 0
      %p80 = por %p78, %p79
      %s81 = ssub.s32 %s21, %s28
      %p82 = scmp.eq.s32.totalorder %s81, 0
      %s84 = sadd.s32 %s83, 1
      %s85 = scalar_select %p82, %s83, %s84
      %p88 = pneg %p82
      %p89 = scmp.eq.s32.totalorder %s21, 1
      %p90 = por %p88, %p89
      %p91 = scmp.ne.s32.totalorder %s83, %s86
      %p92 = scmp.eq.s32.totalorder %s21, 0
      %p93 = por %p91, %p92
      %p94 = scmp.ne.s32.totalorder %s83, %s86
      %p95 = scmp.eq.s32.totalorder %s26, 1
      %p96 = por %p94, %p95
      %p97 = scmp.ne.s32.totalorder %s86, %s87
      %p98 = scmp.eq.s32.totalorder %s26, 0
      %p99 = por %p97, %p98
      %p100 = scmp.ne.s32.totalorder %s86, %s87
      %p101 = scmp.eq.s32.totalorder %s27, 1
      %p102 = por %p100, %p101
      %p104 = scmp.ne.s32.totalorder %s87, %s103
      %p105 = scmp.eq.s32.totalorder %s27, 0
      %p106 = por %p104, %p105
      %s108 = sadd.s32 %s107, 1
      %p111 = scmp.eq.s32.totalorder %s21, 1
      %p112 = scmp.ne.s32.totalorder %s107, %s109
      %p113 = scmp.eq.s32.totalorder %s21, 0
      %p114 = por %p112, %p113
      %p115 = scmp.ne.s32.totalorder %s107, %s109
      %p116 = scmp.eq.s32.totalorder %s26, 1
      %p117 = por %p115, %p116
      %p118 = scmp.ne.s32.totalorder %s109, %s110
      %p119 = scmp.eq.s32.totalorder %s26, 0
      %p120 = por %p118, %p119
      %p121 = scmp.ne.s32.totalorder %s109, %s110
      %p122 = scmp.eq.s32.totalorder %s27, 1
      %p123 = por %p121, %p122
      %p125 = scmp.ne.s32.totalorder %s110, %s124
      %p126 = scmp.eq.s32.totalorder %s27, 0
      %p127 = por %p125, %p126
      %s129 = sadd.s32 %s128, 1
      %p132 = scmp.eq.s32.totalorder %s21, 1
      %p133 = scmp.ne.s32.totalorder %s128, %s130
      %p134 = scmp.eq.s32.totalorder %s21, 0
      %p135 = por %p133, %p134
      %p136 = scmp.ne.s32.totalorder %s128, %s130
      %p137 = scmp.eq.s32.totalorder %s26, 1
      %p138 = por %p136, %p137
      %p139 = scmp.ne.s32.totalorder %s130, %s131
      %p140 = scmp.eq.s32.totalorder %s26, 0
      %p141 = por %p139, %p140
      %p142 = scmp.ne.s32.totalorder %s130, %s131
      %p143 = scmp.eq.s32.totalorder %s27, 1
      %p144 = por %p142, %p143
      %p146 = scmp.ne.s32.totalorder %s131, %s145
      %p147 = scmp.eq.s32.totalorder %s27, 0
      %p148 = por %p146, %p147
      %s150 = sadd.s32 %s149, 1
      %p153 = scmp.eq.s32.totalorder %s21, 1
      %p154 = scmp.ne.s32.totalorder %s149, %s151
      %p155 = scmp.eq.s32.totalorder %s21, 0
      %p156 = por %p154, %p155
      %p157 = scmp.ne.s32.totalorder %s149, %s151
      %p158 = scmp.eq.s32.totalorder %s26, 1
      %p159 = por %p157, %p158
      %p160 = scmp.ne.s32.totalorder %s151, %s152
      %p161 = scmp.eq.s32.totalorder %s26, 0
      %p162 = por %p160, %p161
      %p163 = scmp.ne.s32.totalorder %s151, %s152
      %p164 = scmp.eq.s32.totalorder %s27, 1
      %p165 = por %p163, %p164
      %p167 = scmp.ne.s32.totalorder %s152, %s166
      %p168 = scmp.eq.s32.totalorder %s27, 0
      %p169 = por %p167, %p168
      %s171 = sadd.s32 %s170, 1
      %p174 = scmp.eq.s32.totalorder %s21, 1
      %p175 = scmp.ne.s32.totalorder %s170, %s172
      %p176 = scmp.eq.s32.totalorder %s21, 0
      %p177 = por %p175, %p176
      %p178 = scmp.ne.s32.totalorder %s170, %s172
      %p179 = scmp.eq.s32.totalorder %s26, 1
      %p180 = por %p178, %p179
      %p181 = scmp.ne.s32.totalorder %s172, %s173
      %p182 = scmp.eq.s32.totalorder %s26, 0
      %p183 = por %p181, %p182
      %p184 = scmp.ne.s32.totalorder %s172, %s173
      %p185 = scmp.eq.s32.totalorder %s27, 1
      %p186 = por %p184, %p185
      %p188 = scmp.ne.s32.totalorder %s173, %s187
      %p189 = scmp.eq.s32.totalorder %s27, 0
      %p190 = por %p188, %p189
      %s192 = sadd.s32 %s191, 1
      %p195 = scmp.eq.s32.totalorder %s21, 1
      %p196 = scmp.ne.s32.totalorder %s191, %s193
      %p197 = scmp.eq.s32.totalorder %s21, 0
      %p198 = por %p196, %p197
      %p199 = scmp.ne.s32.totalorder %s191, %s193
      %p200 = scmp.eq.s32.totalorder %s26, 1
      %p201 = por %p199, %p200
      %p202 = scmp.ne.s32.totalorder %s193, %s194
      %p203 = scmp.eq.s32.totalorder %s26, 0
      %p204 = por %p202, %p203
      %p205 = scmp.ne.s32.totalorder %s193, %s194
      %p206 = scmp.eq.s32.totalorder %s27, 1
      %p207 = por %p205, %p206
      %p209 = scmp.ne.s32.totalorder %s194, %s208
      %p210 = scmp.eq.s32.totalorder %s27, 0
      %p211 = por %p209, %p210
      %s213 = sadd.s32 %s212, 1
      %p216 = scmp.eq.s32.totalorder %s21, 1
      %p217 = scmp.ne.s32.totalorder %s212, %s214
      %p218 = scmp.eq.s32.totalorder %s21, 0
      %p219 = por %p217, %p218
      %p220 = scmp.ne.s32.totalorder %s212, %s214
      %p221 = scmp.eq.s32.totalorder %s26, 1
      %p222 = por %p220, %p221
      %p223 = scmp.ne.s32.totalorder %s214, %s215
      %p224 = scmp.eq.s32.totalorder %s26, 0
      %p225 = por %p223, %p224
      %p226 = scmp.ne.s32.totalorder %s214, %s215
      %p227 = scmp.eq.s32.totalorder %s27, 1
      %p228 = por %p226, %p227
      %p230 = scmp.ne.s32.totalorder %s215, %s229
      %p231 = scmp.eq.s32.totalorder %s27, 0
      %p232 = por %p230, %p231
      %s234 = sadd.s32 %s233, 1
      %p237 = scmp.eq.s32.totalorder %s21, 1
      %p238 = scmp.ne.s32.totalorder %s233, %s235
      %p239 = scmp.eq.s32.totalorder %s21, 0
      %p240 = por %p238, %p239
      %p241 = scmp.ne.s32.totalorder %s233, %s235
      %p242 = scmp.eq.s32.totalorder %s26, 1
      %p243 = por %p241, %p242
      %p244 = scmp.ne.s32.totalorder %s235, %s236
      %p245 = scmp.eq.s32.totalorder %s26, 0
      %p246 = por %p244, %p245
      %p247 = scmp.ne.s32.totalorder %s235, %s236
      %p248 = scmp.eq.s32.totalorder %s27, 1
      %p249 = por %p247, %p248
      %p251 = scmp.ne.s32.totalorder %s236, %s250
      %p252 = scmp.eq.s32.totalorder %s27, 0
      %p253 = por %p251, %p252
      %s255 = sadd.s32 %s254, 1
      %p258 = scmp.eq.s32.totalorder %s21, 1
      %p259 = scmp.ne.s32.totalorder %s254, %s256
      %p260 = scmp.eq.s32.totalorder %s21, 0
      %p261 = por %p259, %p260
      %p262 = scmp.ne.s32.totalorder %s254, %s256
      %p263 = scmp.eq.s32.totalorder %s26, 1
      %p264 = por %p262, %p263
      %p265 = scmp.ne.s32.totalorder %s256, %s257
      %p266 = scmp.eq.s32.totalorder %s26, 0
      %p267 = por %p265, %p266
      %p268 = scmp.ne.s32.totalorder %s256, %s257
      %p269 = scmp.eq.s32.totalorder %s27, 1
      %p270 = por %p268, %p269
      %p272 = scmp.ne.s32.totalorder %s257, %s271
      %p273 = scmp.eq.s32.totalorder %s27, 0
      %p274 = por %p272, %p273
      %s275 = ssub.s32 %s21, %s28
      %p276 = scmp.eq.s32.totalorder %s275, 0
      %s278 = sadd.s32 %s277, 1
      %s279 = scalar_select %p276, %s277, %s278
      %p282 = pneg %p276
      %p283 = scmp.eq.s32.totalorder %s21, 1
      %p284 = por %p282, %p283
      %p285 = scmp.ne.s32.totalorder %s277, %s280
      %p286 = scmp.eq.s32.totalorder %s21, 0
      %p287 = por %p285, %p286
      %p288 = scmp.ne.s32.totalorder %s277, %s280
      %p289 = scmp.eq.s32.totalorder %s26, 1
      %p290 = por %p288, %p289
      %p291 = scmp.ne.s32.totalorder %s280, %s281
      %p292 = scmp.eq.s32.totalorder %s26, 0
      %p293 = por %p291, %p292
      %p294 = scmp.ne.s32.totalorder %s280, %s281
      %p295 = scmp.eq.s32.totalorder %s27, 1
      %p296 = por %p294, %p295
      %p298 = scmp.ne.s32.totalorder %s281, %s297
      %p299 = scmp.eq.s32.totalorder %s27, 0
      %p300 = por %p298, %p299
      %p301 = scmp.le.s32.totalorder 1, %s21
      %p302 = scmp.lt.s32.totalorder %s21, 3
      %p303 = pnand %p301, %p302
      %p304 = pneg %p303
      // Predicated region
      $region9: #{tpu_custom_call.1} parent=5 // pred_check
        _
      $region10: #{tpu_custom_call.1} parent=5 // pred_check_branch
        %306 = sbr.rel (%p303) target = $region12
      $region11: #{tpu_custom_call.1} parent=5 // pred_region
        %s307 = ssub.s32 %s21, 1
        // Predicated region
        $region13: #{tpu_custom_call.1} parent=11 // pred_check
          %p308 = pneg %p120
        $region14: #{tpu_custom_call.1} parent=11 // pred_check_branch
          %310 = sbr.rel (%p308) target = $region16
        $region15: #{tpu_custom_call.1} parent=11 // pred_region
          %s312 = ssub.s32 128, 128
          %313 = vsyncadd [#allocation3], %s312
          %s314 = sshll.u32 [#allocation2], 4
          %s315 = int_to_ptr.vmem [resolvable:$true] %s314
          %320 = dma.hbm_to_vmem [thread:$0]  %s3, 128, %s315, [#allocation3], 64, 64, 4
        $region16: #{tpu_custom_call.1} parent=11 // pred_fallthru
          _
        // Predicated region
        $region17: #{tpu_custom_call.1} parent=11 // pred_check
          %p321 = pneg %p141
        $region18: #{tpu_custom_call.1} parent=11 // pred_check_branch
          %323 = sbr.rel (%p321) target = $region20
        $region19: #{tpu_custom_call.1} parent=11 // pred_region
          _
        $region20: #{tpu_custom_call.1} parent=11 // pred_fallthru
          _
        // Predicated region
        $region21: #{tpu_custom_call.1} parent=11 // pred_check
          %p324 = pneg %p162
        $region22: #{tpu_custom_call.1} parent=11 // pred_check_branch
          %326 = sbr.rel (%p324) target = $region24
        $region23: #{tpu_custom_call.1} parent=11 // pred_region
          _
        $region24: #{tpu_custom_call.1} parent=11 // pred_fallthru
          _
        // Predicated region
        $region25: #{tpu_custom_call.1} parent=11 // pred_check
          %p327 = pneg %p183
        $region26: #{tpu_custom_call.1} parent=11 // pred_check_branch
          %329 = sbr.rel (%p327) target = $region28
        $region27: #{tpu_custom_call.1} parent=11 // pred_region
          _
        $region28: #{tpu_custom_call.1} parent=11 // pred_fallthru
          _
        // Predicated region
        $region29: #{tpu_custom_call.1} parent=11 // pred_check
          %p330 = pneg %p204
        $region30: #{tpu_custom_call.1} parent=11 // pred_check_branch
          %332 = sbr.rel (%p330) target = $region32
        $region31: #{tpu_custom_call.1} parent=11 // pred_region
          _
        $region32: #{tpu_custom_call.1} parent=11 // pred_fallthru
          _
        // Predicated region
        $region33: #{tpu_custom_call.1} parent=11 // pred_check
          %p333 = pneg %p225
        $region34: #{tpu_custom_call.1} parent=11 // pred_check_branch
          %335 = sbr.rel (%p333) target = $region36
        $region35: #{tpu_custom_call.1} parent=11 // pred_region
          _
        $region36: #{tpu_custom_call.1} parent=11 // pred_fallthru
          _
        // Predicated region
        $region37: #{tpu_custom_call.1} parent=11 // pred_check
          %p336 = pneg %p246
        $region38: #{tpu_custom_call.1} parent=11 // pred_check_branch
          %338 = sbr.rel (%p336) target = $region40
        $region39: #{tpu_custom_call.1} parent=11 // pred_region
          _
        $region40: #{tpu_custom_call.1} parent=11 // pred_fallthru
          _
        // Predicated region
        $region41: #{tpu_custom_call.1} parent=11 // pred_check
          %p339 = pneg %p267
        $region42: #{tpu_custom_call.1} parent=11 // pred_check_branch
          %341 = sbr.rel (%p339) target = $region44
        $region43: #{tpu_custom_call.1} parent=11 // pred_region
          _
        $region44: #{tpu_custom_call.1} parent=11 // pred_fallthru
          _
      $region12: #{tpu_custom_call.1} parent=5 // pred_fallthru
        _
      %p342 = scmp.lt.s32.totalorder %s21, 2
      // Predicated region
      $region45: #{tpu_custom_call.1} parent=5 // pred_check
        %p343 = pneg %p342
      $region46: #{tpu_custom_call.1} parent=5 // pred_check_branch
        %345 = sbr.rel (%p343) target = $region48
      $region47: #{tpu_custom_call.1} parent=5 // pred_region
        // Predicated region
        $region49: #{tpu_custom_call.1} parent=47 // pred_check
          %p346 = pneg %p41
        $region50: #{tpu_custom_call.1} parent=47 // pred_check_branch
          %348 = sbr.rel (%p346) target = $region52
        $region51: #{tpu_custom_call.1} parent=47 // pred_region
          %p349 = scmp.lt.s32.totalorder %s21, 1
          %s350 = scalar_select %p349, %s21, 1
          %s351 = smul.addr %s350, 4
          %s352 = scalar_lea.vmem %s0, %s351
        $region52: #{tpu_custom_call.1} parent=47 // pred_fallthru
          _
        // Predicated region
        $region53: #{tpu_custom_call.1} parent=47 // pred_check
          %p353 = pneg %p67
        $region54: #{tpu_custom_call.1} parent=47 // pred_check_branch
          %355 = sbr.rel (%p353) target = $region56
        $region55: #{tpu_custom_call.1} parent=47 // pred_region
          %p356 = scmp.lt.s32.totalorder %s21, 1
          %s357 = scalar_select %p356, %s21, 1
          %s358 = smul.addr %s357, 4
          %s359 = scalar_lea.vmem %s1, %s358
        $region56: #{tpu_custom_call.1} parent=47 // pred_fallthru
          _
        // Predicated region
        $region57: #{tpu_custom_call.1} parent=47 // pred_check
          %p360 = pneg %p93
        $region58: #{tpu_custom_call.1} parent=47 // pred_check_branch
          %362 = sbr.rel (%p360) target = $region60
        $region59: #{tpu_custom_call.1} parent=47 // pred_region
          %p363 = scmp.lt.s32.totalorder %s21, 1
          %s364 = scalar_select %p363, %s21, 1
          %s365 = smul.addr %s364, 4
          %s366 = scalar_lea.vmem %s2, %s365
        $region60: #{tpu_custom_call.1} parent=47 // pred_fallthru
          _
      $region48: #{tpu_custom_call.1} parent=5 // pred_fallthru
        _
      %p367 = scmp.le.s32.totalorder 1, %s21
      %p368 = scmp.lt.s32.totalorder %s21, 3
      %p369 = pnand %p367, %p368
      %p370 = pneg %p369
      // Predicated region
      $region61: #{tpu_custom_call.1} parent=5 // pred_check
        _
      $region62: #{tpu_custom_call.1} parent=5 // pred_check_branch
        %372 = sbr.rel (%p369) target = $region64
      $region63: #{tpu_custom_call.1} parent=5 // pred_region
        %s373 = ssub.s32 %s21, 1
        // Predicated region
        $region65: #{tpu_custom_call.1} parent=63 // pred_check
          %p374 = pneg %p120
        $region66: #{tpu_custom_call.1} parent=63 // pred_check_branch
          %376 = sbr.rel (%p374) target = $region68
        $region67: #{tpu_custom_call.1} parent=63 // pred_region
          %377 = dma.done [#allocation3], 128
        $region68: #{tpu_custom_call.1} parent=63 // pred_fallthru
          _
        %p378 = scmp.lt.s32.totalorder %s26, 1
        %s379 = scalar_select %p378, %s26, 1
        %s380 = smul.addr %s379, 4
        %s381 = scalar_lea.vmem %s0, %s380
        %p382 = pneg %p47
        %p383 = pneg %p44
        %p384 = scmp.lt.s32.totalorder %s26, 1
        %s385 = scalar_select %p384, %s26, 1
        %s386 = smul.addr %s385, 4
        %s387 = scalar_lea.vmem %s1, %s386
        %p388 = pneg %p73
        %p389 = pneg %p70
        %p390 = scmp.lt.s32.totalorder %s26, 1
        %s391 = scalar_select %p390, %s26, 1
        %s392 = smul.addr %s391, 4
        %s393 = scalar_lea.vmem %s2, %s392
        %p394 = pneg %p99
        %p395 = pneg %p96
        %p396 = pneg %p120
        %p397 = pneg %p117
        %p398 = pneg %p141
        %p399 = pneg %p138
        %p400 = pneg %p162
        %p401 = pneg %p159
        %p402 = pneg %p183
        %p403 = pneg %p180
        %p404 = pneg %p204
        %p405 = pneg %p201
        %p406 = pneg %p225
        %p407 = pneg %p222
        %p408 = pneg %p246
        %p409 = pneg %p243
        %p410 = pneg %p267
        %p411 = pneg %p264
        %p412 = pneg %p293
        %p413 = pneg %p290
        %s414 = sand.u32 %s280, 1
        %s415 = scalar_lea.sflag [#allocation4], %s414
        %s416 = sand.u32 %s280, 1
        %s417 = smul.addr %s416, 8
        %s418 = scalar_lea.vmem [#allocation5], %s417
        %p419 = scmp.lt.s32.totalorder %s26, 1
        %s420 = scalar_select %p419, %s26, 1
        %s421 = smul.addr %s420, 4
        %s422 = scalar_lea.vmem %s0, %s421
        %p423 = scmp.lt.s32.totalorder %s26, 1
        %s424 = scalar_select %p423, %s26, 1
        %s425 = smul.addr %s424, 4
        %s426 = scalar_lea.vmem %s1, %s425
        %p427 = scmp.lt.s32.totalorder %s26, 1
        %s428 = scalar_select %p427, %s26, 1
        %s429 = smul.addr %s428, 4
        %s430 = scalar_lea.vmem %s2, %s429
        %v432 = vld [vmem:[%s422] sm:$0xf]
        %v433 = vld [vmem:[#allocation2] sm:$0xf]
        %v434 = vld [vmem:[#allocation2 + $0x4] sm:$0xf]
        %v435 = vld [vmem:[%s4] sm:$0x1]
        %v437 = vlaneseq
        %v438 = vshrl.u32 %v437, 7
        %v439 = vsub.s32 0, %v438
        %v440 = vrot.slane %v435, %v439
        %v444 = vunpack.c.l.b16 %v433
        %v445 = vunpack.c.l.b16 %v434
        %v446 = vpack.c.b16 %v445, %v444
        %vm448 = vcmask 130048
        %v450 = vsel %vm448, %v432, 0
        %452 = vmatprep.subr.bf16.mxu0 0
        %453 = vmatpush1.bf16.msra.mxu0 %v446
        %454 = vmatprep.subr.bf16.mxu0 0
        %455 = vmatpush1.bf16.msra.mxu0 0
        %456 = vmatprep.subr.bf16.mxu0 0
        %457 = vmatpush1.bf16.msra.mxu0 0
        %458 = vmatprep.subr.bf16.mxu0 0
        %459 = vmatpush1.bf16.msra.mxu0 0
        %460 = vmatprep.subr.bf16.mxu0 0
        %461 = vmatpush1.bf16.msra.mxu0 0
        %462 = vmatprep.subr.bf16.mxu0 0
        %463 = vmatpush1.bf16.msra.mxu0 0
        %464 = vmatprep.subr.bf16.mxu0 0
        %465 = vmatpush1.bf16.msra.mxu0 0
        %466 = vmatprep.subr.bf16.mxu0 0
        %467 = vmatpush1.bf16.msra.mxu0 0
        %468 = vmatprep.subr.bf16.mxu0 0
        %469 = vmatpush1.bf16.msra.mxu0 0
        %470 = vmatprep.subr.bf16.mxu0 0
        %471 = vmatpush1.bf16.msra.mxu0 0
        %472 = vmatprep.subr.bf16.mxu0 0
        %473 = vmatpush1.bf16.msra.mxu0 0
        %474 = vmatprep.subr.bf16.mxu0 0
        %475 = vmatpush1.bf16.msra.mxu0 0
        %476 = vmatprep.subr.bf16.mxu0 0
        %477 = vmatpush1.bf16.msra.mxu0 0
        %478 = vmatprep.subr.bf16.mxu0 0
        %479 = vmatpush1.bf16.msra.mxu0 0
        %480 = vmatprep.subr.bf16.mxu0 0
        %481 = vmatpush1.bf16.msra.mxu0 0
        %482 = vmatprep.subr.bf16.mxu0 0
        %483 = vmatpush1.bf16.msra.mxu0 0
        %484 = vmatprep.mubr.bf16.mxu0 0
        %485 = vmatmul.mubr.bf16.gmra.mrb[0].mxu0 %v450
        %v486 = vpop.f32.mrb[0].mxu0
        %v487 = vadd.f32 %v440, %v486
        %v488 = vpop.f32.mrb[0].mxu0
        %v489 = vpop.f32.mrb[0].mxu0
        %v490 = vpop.f32.mrb[0].mxu0
        %491 = vdwg.mxu0
        %v492 = vld [vmem:[%s426] sm:$0xf]
        %v493 = vld [vmem:[%s5] sm:$0xf]
        %v494 = vld [vmem:[%s5 + $0x4] sm:$0xf]
        %v495 = vld [vmem:[%s6] sm:$0x1]
        %v497 = vlaneseq
        %v498 = vshrl.u32 %v497, 7
        %v499 = vsub.s32 0, %v498
        %v500 = vrot.slane %v495, %v499
        %v504 = vunpack.c.l.b16 %v493
        %v505 = vunpack.c.l.b16 %v494
        %v506 = vpack.c.b16 %v505, %v504
        %v509 = vsel %vm448, %v492, 0
        %511 = vmatprep.subr.bf16.mxu0 0
        %512 = vmatpush1.bf16.msra.mxu0 %v506
        %513 = vmatprep.subr.bf16.mxu0 0
        %514 = vmatpush1.bf16.msra.mxu0 0
        %515 = vmatprep.subr.bf16.mxu0 0
        %516 = vmatpush1.bf16.msra.mxu0 0
        %517 = vmatprep.subr.bf16.mxu0 0
        %518 = vmatpush1.bf16.msra.mxu0 0
        %519 = vmatprep.subr.bf16.mxu0 0
        %520 = vmatpush1.bf16.msra.mxu0 0
        %521 = vmatprep.subr.bf16.mxu0 0
        %522 = vmatpush1.bf16.msra.mxu0 0
        %523 = vmatprep.subr.bf16.mxu0 0
        %524 = vmatpush1.bf16.msra.mxu0 0
        %525 = vmatprep.subr.bf16.mxu0 0
        %526 = vmatpush1.bf16.msra.mxu0 0
        %527 = vmatprep.subr.bf16.mxu0 0
        %528 = vmatpush1.bf16.msra.mxu0 0
        %529 = vmatprep.subr.bf16.mxu0 0
        %530 = vmatpush1.bf16.msra.mxu0 0
        %531 = vmatprep.subr.bf16.mxu0 0
        %532 = vmatpush1.bf16.msra.mxu0 0
        %533 = vmatprep.subr.bf16.mxu0 0
        %534 = vmatpush1.bf16.msra.mxu0 0
        %535 = vmatprep.subr.bf16.mxu0 0
        %536 = vmatpush1.bf16.msra.mxu0 0
        %537 = vmatprep.subr.bf16.mxu0 0
        %538 = vmatpush1.bf16.msra.mxu0 0
        %539 = vmatprep.subr.bf16.mxu0 0
        %540 = vmatpush1.bf16.msra.mxu0 0
        %541 = vmatprep.subr.bf16.mxu0 0
        %542 = vmatpush1.bf16.msra.mxu0 0
        %543 = vmatprep.mubr.bf16.mxu0 0
        %544 = vmatmul.mubr.bf16.gmra.mrb[0].mxu0 %v509
        %v545 = vpop.f32.mrb[0].mxu0
        %v546 = vadd.f32 %v500, %v545
        %v547 = vpop.f32.mrb[0].mxu0
        %v548 = vpop.f32.mrb[0].mxu0
        %v549 = vpop.f32.mrb[0].mxu0
        %550 = vdwg.mxu0
        %v551 = vld [vmem:[%s430] sm:$0xf]
        %v552 = vld [vmem:[%s7] sm:$0xf]
        %v553 = vld [vmem:[%s7 + $0x4] sm:$0xf]
        %v554 = vld [vmem:[%s8] sm:$0x1]
        %v556 = vlaneseq
        %v557 = vshrl.u32 %v556, 7
        %v558 = vsub.s32 0, %v557
        %v559 = vrot.slane %v554, %v558
        %v563 = vunpack.c.l.b16 %v552
        %v564 = vunpack.c.l.b16 %v553
        %v565 = vpack.c.b16 %v564, %v563
        %v568 = vsel %vm448, %v551, 0
        %570 = vmatprep.subr.bf16.mxu0 0
        %571 = vmatpush1.bf16.msra.mxu0 %v565
        %572 = vmatprep.subr.bf16.mxu0 0
        %573 = vmatpush1.bf16.msra.mxu0 0
        %574 = vmatprep.subr.bf16.mxu0 0
        %575 = vmatpush1.bf16.msra.mxu0 0
        %576 = vmatprep.subr.bf16.mxu0 0
        %577 = vmatpush1.bf16.msra.mxu0 0
        %578 = vmatprep.subr.bf16.mxu0 0
        %579 = vmatpush1.bf16.msra.mxu0 0
        %580 = vmatprep.subr.bf16.mxu0 0
        %581 = vmatpush1.bf16.msra.mxu0 0
        %582 = vmatprep.subr.bf16.mxu0 0
        %583 = vmatpush1.bf16.msra.mxu0 0
        %584 = vmatprep.subr.bf16.mxu0 0
        %585 = vmatpush1.bf16.msra.mxu0 0
        %586 = vmatprep.subr.bf16.mxu0 0
        %587 = vmatpush1.bf16.msra.mxu0 0
        %588 = vmatprep.subr.bf16.mxu0 0
        %589 = vmatpush1.bf16.msra.mxu0 0
        %590 = vmatprep.subr.bf16.mxu0 0
        %591 = vmatpush1.bf16.msra.mxu0 0
        %592 = vmatprep.subr.bf16.mxu0 0
        %593 = vmatpush1.bf16.msra.mxu0 0
        %594 = vmatprep.subr.bf16.mxu0 0
        %595 = vmatpush1.bf16.msra.mxu0 0
        %596 = vmatprep.subr.bf16.mxu0 0
        %597 = vmatpush1.bf16.msra.mxu0 0
        %598 = vmatprep.subr.bf16.mxu0 0
        %599 = vmatpush1.bf16.msra.mxu0 0
        %600 = vmatprep.subr.bf16.mxu0 0
        %601 = vmatpush1.bf16.msra.mxu0 0
        %602 = vmatprep.mubr.bf16.mxu0 0
        %603 = vmatmul.mubr.bf16.gmra.mrb[0].mxu0 %v568
        %v604 = vpop.f32.mrb[0].mxu0
        %v605 = vadd.f32 %v559, %v604
        %v606 = vpop.f32.mrb[0].mxu0
        %v607 = vpop.f32.mrb[0].mxu0
        %v608 = vpop.f32.mrb[0].mxu0
        %609 = vdwg.mxu0
        %v610 = vpack.c.bf16 %v487, %v487
        %612 = vrot.lane.b32.xlu0 %v610, 120
        %v613 = vpop.permute.xlu0 %612
        %614 = vrot.lane.b32.xlu0 %v610, 112
        %v615 = vpop.permute.xlu0 %614
        %616 = vrot.lane.b32.xlu0 %v610, 104
        %v617 = vpop.permute.xlu0 %616
        %v618 = vpack.c.bf16 %v546, %v546
        %620 = vrot.lane.b32.xlu0 %v618, 120
        %v621 = vpop.permute.xlu0 %620
        %622 = vrot.lane.b32.xlu0 %v618, 112
        %v623 = vpop.permute.xlu0 %622
        %624 = vrot.lane.b32.xlu0 %v618, 104
        %v625 = vpop.permute.xlu0 %624
        %v626 = vpack.c.bf16 %v605, %v605
        %628 = vrot.lane.b32.xlu0 %v626, 120
        %v629 = vpop.permute.xlu0 %628
        %630 = vrot.lane.b32.xlu0 %v626, 112
        %v631 = vpop.permute.xlu0 %630
        %632 = vrot.lane.b32.xlu0 %v626, 104
        %v633 = vpop.permute.xlu0 %632
        %vm634 = vcmask 64512
        %v636 = vsel %vm634, %v626, 0
        %v639 = vsel %vm634, %v618, 0
        %641 = vmatprep.subr.bf16.mxu0 0
        %642 = vmatpush1.bf16.xpose.msra.mxu0 %v639
        %643 = vmatprep.subr.bf16.mxu0 0
        %644 = vmatpush1.bf16.xpose.msra.mxu0 0
        %645 = vmatprep.subr.bf16.mxu0 0
        %646 = vmatpush1.bf16.xpose.msra.mxu0 0
        %647 = vmatprep.subr.bf16.mxu0 0
        %648 = vmatpush1.bf16.xpose.msra.mxu0 0
        %649 = vmatprep.subr.bf16.mxu0 0
        %650 = vmatpush1.bf16.xpose.msra.mxu0 0
        %651 = vmatprep.subr.bf16.mxu0 0
        %652 = vmatpush1.bf16.xpose.msra.mxu0 0
        %653 = vmatprep.subr.bf16.mxu0 0
        %654 = vmatpush1.bf16.xpose.msra.mxu0 0
        %655 = vmatprep.subr.bf16.mxu0 0
        %656 = vmatpush1.bf16.xpose.msra.mxu0 0
        %657 = vmatprep.subr.bf16.mxu0 0
        %658 = vmatpush1.bf16.xpose.msra.mxu0 0
        %659 = vmatprep.subr.bf16.mxu0 0
        %660 = vmatpush1.bf16.xpose.msra.mxu0 0
        %661 = vmatprep.subr.bf16.mxu0 0
        %662 = vmatpush1.bf16.xpose.msra.mxu0 0
        %663 = vmatprep.subr.bf16.mxu0 0
        %664 = vmatpush1.bf16.xpose.msra.mxu0 0
        %665 = vmatprep.subr.bf16.mxu0 0
        %666 = vmatpush1.bf16.xpose.msra.mxu0 0
        %667 = vmatprep.subr.bf16.mxu0 0
        %668 = vmatpush1.bf16.xpose.msra.mxu0 0
        %669 = vmatprep.subr.bf16.mxu0 0
        %670 = vmatpush1.bf16.xpose.msra.mxu0 0
        %671 = vmatprep.subr.bf16.mxu0 0
        %672 = vmatpush1.bf16.xpose.msra.mxu0 0
        %673 = vmatprep.mubr.bf16.mxu0 0
        %674 = vmatmul.mubr.bf16.gmra.mrb[0].mxu0 %v636
        %v675 = vpop.f32.mrb[0].mxu0
        %v676 = vadd.f32 0.0, %v675
        %v677 = vpop.f32.mrb[0].mxu0
        %v678 = vpop.f32.mrb[0].mxu0
        %v679 = vpop.f32.mrb[0].mxu0
        %680 = vdwg.mxu0
        %v682 = vsel %vm634, %v629, 0
        %v685 = vsel %vm634, %v621, 0
        %687 = vmatprep.subr.bf16.mxu0 0
        %688 = vmatpush1.bf16.xpose.msra.mxu0 %v685
        %689 = vmatprep.subr.bf16.mxu0 0
        %690 = vmatpush1.bf16.xpose.msra.mxu0 0
        %691 = vmatprep.subr.bf16.mxu0 0
        %692 = vmatpush1.bf16.xpose.msra.mxu0 0
        %693 = vmatprep.subr.bf16.mxu0 0
        %694 = vmatpush1.bf16.xpose.msra.mxu0 0
        %695 = vmatprep.subr.bf16.mxu0 0
        %696 = vmatpush1.bf16.xpose.msra.mxu0 0
        %697 = vmatprep.subr.bf16.mxu0 0
        %698 = vmatpush1.bf16.xpose.msra.mxu0 0
        %699 = vmatprep.subr.bf16.mxu0 0
        %700 = vmatpush1.bf16.xpose.msra.mxu0 0
        %701 = vmatprep.subr.bf16.mxu0 0
        %702 = vmatpush1.bf16.xpose.msra.mxu0 0
        %703 = vmatprep.subr.bf16.mxu0 0
        %704 = vmatpush1.bf16.xpose.msra.mxu0 0
        %705 = vmatprep.subr.bf16.mxu0 0
        %706 = vmatpush1.bf16.xpose.msra.mxu0 0
        %707 = vmatprep.subr.bf16.mxu0 0
        %708 = vmatpush1.bf16.xpose.msra.mxu0 0
        %709 = vmatprep.subr.bf16.mxu0 0
        %710 = vmatpush1.bf16.xpose.msra.mxu0 0
        %711 = vmatprep.subr.bf16.mxu0 0
        %712 = vmatpush1.bf16.xpose.msra.mxu0 0
        %713 = vmatprep.subr.bf16.mxu0 0
        %714 = vmatpush1.bf16.xpose.msra.mxu0 0
        %715 = vmatprep.subr.bf16.mxu0 0
        %716 = vmatpush1.bf16.xpose.msra.mxu0 0
        %717 = vmatprep.subr.bf16.mxu0 0
        %718 = vmatpush1.bf16.xpose.msra.mxu0 0
        %719 = vmatprep.mubr.bf16.mxu0 0
        %720 = vmatmul.mubr.bf16.gmra.mrb[0].mxu0 %v682
        %v721 = vpop.f32.mrb[0].mxu0
        %v722 = vadd.f32 0.0, %v721
        %v723 = vpop.f32.mrb[0].mxu0
        %v724 = vpop.f32.mrb[0].mxu0
        %v725 = vpop.f32.mrb[0].mxu0
        %726 = vdwg.mxu0
        %v728 = vsel %vm634, %v631, 0
        %v731 = vsel %vm634, %v623, 0
        %733 = vmatprep.subr.bf16.mxu0 0
        %734 = vmatpush1.bf16.xpose.msra.mxu0 %v731
        %735 = vmatprep.subr.bf16.mxu0 0
        %736 = vmatpush1.bf16.xpose.msra.mxu0 0
        %737 = vmatprep.subr.bf16.mxu0 0
        %738 = vmatpush1.bf16.xpose.msra.mxu0 0
        %739 = vmatprep.subr.bf16.mxu0 0
        %740 = vmatpush1.bf16.xpose.msra.mxu0 0
        %741 = vmatprep.subr.bf16.mxu0 0
        %742 = vmatpush1.bf16.xpose.msra.mxu0 0
        %743 = vmatprep.subr.bf16.mxu0 0
        %744 = vmatpush1.bf16.xpose.msra.mxu0 0
        %745 = vmatprep.subr.bf16.mxu0 0
        %746 = vmatpush1.bf16.xpose.msra.mxu0 0
        %747 = vmatprep.subr.bf16.mxu0 0
        %748 = vmatpush1.bf16.xpose.msra.mxu0 0
        %749 = vmatprep.subr.bf16.mxu0 0
        %750 = vmatpush1.bf16.xpose.msra.mxu0 0
        %751 = vmatprep.subr.bf16.mxu0 0
        %752 = vmatpush1.bf16.xpose.msra.mxu0 0
        %753 = vmatprep.subr.bf16.mxu0 0
        %754 = vmatpush1.bf16.xpose.msra.mxu0 0
        %755 = vmatprep.subr.bf16.mxu0 0
        %756 = vmatpush1.bf16.xpose.msra.mxu0 0
        %757 = vmatprep.subr.bf16.mxu0 0
        %758 = vmatpush1.bf16.xpose.msra.mxu0 0
        %759 = vmatprep.subr.bf16.mxu0 0
        %760 = vmatpush1.bf16.xpose.msra.mxu0 0
        %761 = vmatprep.subr.bf16.mxu0 0
        %762 = vmatpush1.bf16.xpose.msra.mxu0 0
        %763 = vmatprep.subr.bf16.mxu0 0
        %764 = vmatpush1.bf16.xpose.msra.mxu0 0
        %765 = vmatprep.mubr.bf16.mxu0 0
        %766 = vmatmul.mubr.bf16.gmra.mrb[0].mxu0 %v728
        %v767 = vpop.f32.mrb[0].mxu0
        %v768 = vadd.f32 0.0, %v767
        %v769 = vpop.f32.mrb[0].mxu0
        %v770 = vpop.f32.mrb[0].mxu0
        %v771 = vpop.f32.mrb[0].mxu0
        %772 = vdwg.mxu0
        %v774 = vsel %vm634, %v633, 0
        %v777 = vsel %vm634, %v625, 0
        %779 = vmatprep.subr.bf16.mxu0 0
        %780 = vmatpush1.bf16.xpose.msra.mxu0 %v777
        %781 = vmatprep.subr.bf16.mxu0 0
        %782 = vmatpush1.bf16.xpose.msra.mxu0 0
        %783 = vmatprep.subr.bf16.mxu0 0
        %784 = vmatpush1.bf16.xpose.msra.mxu0 0
        %785 = vmatprep.subr.bf16.mxu0 0
        %786 = vmatpush1.bf16.xpose.msra.mxu0 0
        %787 = vmatprep.subr.bf16.mxu0 0
        %788 = vmatpush1.bf16.xpose.msra.mxu0 0
        %789 = vmatprep.subr.bf16.mxu0 0
        %790 = vmatpush1.bf16.xpose.msra.mxu0 0
        %791 = vmatprep.subr.bf16.mxu0 0
        %792 = vmatpush1.bf16.xpose.msra.mxu0 0
        %793 = vmatprep.subr.bf16.mxu0 0
        %794 = vmatpush1.bf16.xpose.msra.mxu0 0
        %795 = vmatprep.subr.bf16.mxu0 0
        %796 = vmatpush1.bf16.xpose.msra.mxu0 0
        %797 = vmatprep.subr.bf16.mxu0 0
        %798 = vmatpush1.bf16.xpose.msra.mxu0 0
        %799 = vmatprep.subr.bf16.mxu0 0
        %800 = vmatpush1.bf16.xpose.msra.mxu0 0
        %801 = vmatprep.subr.bf16.mxu0 0
        %802 = vmatpush1.bf16.xpose.msra.mxu0 0
        %803 = vmatprep.subr.bf16.mxu0 0
        %804 = vmatpush1.bf16.xpose.msra.mxu0 0
        %805 = vmatprep.subr.bf16.mxu0 0
        %806 = vmatpush1.bf16.xpose.msra.mxu0 0
        %807 = vmatprep.subr.bf16.mxu0 0
        %808 = vmatpush1.bf16.xpose.msra.mxu0 0
        %809 = vmatprep.subr.bf16.mxu0 0
        %810 = vmatpush1.bf16.xpose.msra.mxu0 0
        %811 = vmatprep.mubr.bf16.mxu0 0
        %812 = vmatmul.mubr.bf16.gmra.mrb[0].mxu0 %v774
        %v813 = vpop.f32.mrb[0].mxu0
        %v814 = vadd.f32 0.0, %v813
        %v815 = vpop.f32.mrb[0].mxu0
        %v816 = vpop.f32.mrb[0].mxu0
        %v817 = vpop.f32.mrb[0].mxu0
        %818 = vdwg.mxu0
        %v819 = vsel %vm634, %v676, -inf
        %820 = vmax.xlane.f32.xlu0 %v819
        %v821 = vpop.xlane.xlu0 %820
        %v822 = vsel %vm634, %v722, -inf
        %823 = vmax.xlane.f32.xlu0 %v822
        %v824 = vpop.xlane.xlu0 %823
        %v825 = vsel %vm634, %v768, -inf
        %826 = vmax.xlane.f32.xlu0 %v825
        %v827 = vpop.xlane.xlu0 %826
        %v828 = vsel %vm634, %v814, -inf
        %829 = vmax.xlane.f32.xlu0 %v828
        %v830 = vpop.xlane.xlu0 %829
        %v831 = vsub.f32 %v676, %v821
        %v832 = vsub.f32 %v722, %v824
        %v833 = vsub.f32 %v768, %v827
        %v834 = vsub.f32 %v814, %v830
        %v835 = vmul.f32 %v831, 1.442695
        %v836 = vpow.pop %v835
        %v837 = vmul.f32 %v832, 1.442695
        %v838 = vpow.pop %v837
        %v839 = vmul.f32 %v833, 1.442695
        %v840 = vpow.pop %v839
        %v841 = vmul.f32 %v834, 1.442695
        %v842 = vpow.pop %v841
        %v843 = vsel %vm634, %v836, 0.0
        %844 = vadd.xlane.f32.xlu0 %v843
        %v845 = vpop.xlane.xlu0 %844
        %v846 = vsel %vm634, %v838, 0.0
        %847 = vadd.xlane.f32.xlu0 %v846
        %v848 = vpop.xlane.xlu0 %847
        %v849 = vsel %vm634, %v840, 0.0
        %850 = vadd.xlane.f32.xlu0 %v849
        %v851 = vpop.xlane.xlu0 %850
        %v852 = vsel %vm634, %v842, 0.0
        %853 = vadd.xlane.f32.xlu0 %v852
        %v854 = vpop.xlane.xlu0 %853
        %v855 = vrcp.pop %v845
        %v856 = vrcp.pop %v848
        %v857 = vrcp.pop %v851
        %v858 = vrcp.pop %v854
        %v859 = vmul.f32 %v836, %v855
        %v860 = vmul.f32 %v838, %v856
        %v861 = vmul.f32 %v840, %v857
        %v862 = vmul.f32 %v842, %v858
        %v863 = vpack.c.bf16 %v859, %v859
        %v864 = vpack.c.bf16 %v860, %v860
        %v865 = vpack.c.bf16 %v861, %v861
        %v866 = vpack.c.bf16 %v862, %v862
        %v868 = vsel %vm634, %v863, 0
        %vm870 = vcmask 1043456
        %v872 = vsel %vm870, %v610, 0
        %874 = vmatprep.subr.bf16.mxu0 0
        %875 = vmatpush1.bf16.msra.mxu0 %v872
        %876 = vmatprep.subr.bf16.mxu0 0
        %877 = vmatpush1.bf16.msra.mxu0 0
        %878 = vmatprep.subr.bf16.mxu0 0
        %879 = vmatpush1.bf16.msra.mxu0 0
        %880 = vmatprep.subr.bf16.mxu0 0
        %881 = vmatpush1.bf16.msra.mxu0 0
        %882 = vmatprep.subr.bf16.mxu0 0
        %883 = vmatpush1.bf16.msra.mxu0 0
        %884 = vmatprep.subr.bf16.mxu0 0
        %885 = vmatpush1.bf16.msra.mxu0 0
        %886 = vmatprep.subr.bf16.mxu0 0
        %887 = vmatpush1.bf16.msra.mxu0 0
        %888 = vmatprep.subr.bf16.mxu0 0
        %889 = vmatpush1.bf16.msra.mxu0 0
        %890 = vmatprep.subr.bf16.mxu0 0
        %891 = vmatpush1.bf16.msra.mxu0 0
        %892 = vmatprep.subr.bf16.mxu0 0
        %893 = vmatpush1.bf16.msra.mxu0 0
        %894 = vmatprep.subr.bf16.mxu0 0
        %895 = vmatpush1.bf16.msra.mxu0 0
        %896 = vmatprep.subr.bf16.mxu0 0
        %897 = vmatpush1.bf16.msra.mxu0 0
        %898 = vmatprep.subr.bf16.mxu0 0
        %899 = vmatpush1.bf16.msra.mxu0 0
        %900 = vmatprep.subr.bf16.mxu0 0
        %901 = vmatpush1.bf16.msra.mxu0 0
        %902 = vmatprep.subr.bf16.mxu0 0
        %903 = vmatpush1.bf16.msra.mxu0 0
        %904 = vmatprep.subr.bf16.mxu0 0
        %905 = vmatpush1.bf16.msra.mxu0 0
        %906 = vmatprep.mubr.bf16.mxu0 0
        %907 = vmatmul.mubr.bf16.gmra.mrb[0].mxu0 %v868
        %v908 = vpop.f32.mrb[0].mxu0
        %v909 = vadd.f32 0.0, %v908
        %v910 = vpop.f32.mrb[0].mxu0
        %v911 = vpop.f32.mrb[0].mxu0
        %v912 = vpop.f32.mrb[0].mxu0
        %913 = vdwg.mxu0
        %v915 = vsel %vm634, %v864, 0
        %v918 = vsel %vm870, %v613, 0
        %920 = vmatprep.subr.bf16.mxu0 0
        %921 = vmatpush1.bf16.msra.mxu0 %v918
        %922 = vmatprep.subr.bf16.mxu0 0
        %923 = vmatpush1.bf16.msra.mxu0 0
        %924 = vmatprep.subr.bf16.mxu0 0
        %925 = vmatpush1.bf16.msra.mxu0 0
        %926 = vmatprep.subr.bf16.mxu0 0
        %927 = vmatpush1.bf16.msra.mxu0 0
        %928 = vmatprep.subr.bf16.mxu0 0
        %929 = vmatpush1.bf16.msra.mxu0 0
        %930 = vmatprep.subr.bf16.mxu0 0
        %931 = vmatpush1.bf16.msra.mxu0 0
        %932 = vmatprep.subr.bf16.mxu0 0
        %933 = vmatpush1.bf16.msra.mxu0 0
        %934 = vmatprep.subr.bf16.mxu0 0
        %935 = vmatpush1.bf16.msra.mxu0 0
        %936 = vmatprep.subr.bf16.mxu0 0
        %937 = vmatpush1.bf16.msra.mxu0 0
        %938 = vmatprep.subr.bf16.mxu0 0
        %939 = vmatpush1.bf16.msra.mxu0 0
        %940 = vmatprep.subr.bf16.mxu0 0
        %941 = vmatpush1.bf16.msra.mxu0 0
        %942 = vmatprep.subr.bf16.mxu0 0
        %943 = vmatpush1.bf16.msra.mxu0 0
        %944 = vmatprep.subr.bf16.mxu0 0
        %945 = vmatpush1.bf16.msra.mxu0 0
        %946 = vmatprep.subr.bf16.mxu0 0
        %947 = vmatpush1.bf16.msra.mxu0 0
        %948 = vmatprep.subr.bf16.mxu0 0
        %949 = vmatpush1.bf16.msra.mxu0 0
        %950 = vmatprep.subr.bf16.mxu0 0
        %951 = vmatpush1.bf16.msra.mxu0 0
        %952 = vmatprep.mubr.bf16.mxu0 0
        %953 = vmatmul.mubr.bf16.gmra.mrb[0].mxu0 %v915
        %v954 = vpop.f32.mrb[0].mxu0
        %v955 = vadd.f32 0.0, %v954
        %v956 = vpop.f32.mrb[0].mxu0
        %v957 = vpop.f32.mrb[0].mxu0
        %v958 = vpop.f32.mrb[0].mxu0
        %959 = vdwg.mxu0
        %v961 = vsel %vm634, %v865, 0
        %v964 = vsel %vm870, %v615, 0
        %966 = vmatprep.subr.bf16.mxu0 0
        %967 = vmatpush1.bf16.msra.mxu0 %v964
        %968 = vmatprep.subr.bf16.mxu0 0
        %969 = vmatpush1.bf16.msra.mxu0 0
        %970 = vmatprep.subr.bf16.mxu0 0
        %971 = vmatpush1.bf16.msra.mxu0 0
        %972 = vmatprep.subr.bf16.mxu0 0
        %973 = vmatpush1.bf16.msra.mxu0 0
        %974 = vmatprep.subr.bf16.mxu0 0
        %975 = vmatpush1.bf16.msra.mxu0 0
        %976 = vmatprep.subr.bf16.mxu0 0
        %977 = vmatpush1.bf16.msra.mxu0 0
        %978 = vmatprep.subr.bf16.mxu0 0
        %979 = vmatpush1.bf16.msra.mxu0 0
        %980 = vmatprep.subr.bf16.mxu0 0
        %981 = vmatpush1.bf16.msra.mxu0 0
        %982 = vmatprep.subr.bf16.mxu0 0
        %983 = vmatpush1.bf16.msra.mxu0 0
        %984 = vmatprep.subr.bf16.mxu0 0
        %985 = vmatpush1.bf16.msra.mxu0 0
        %986 = vmatprep.subr.bf16.mxu0 0
        %987 = vmatpush1.bf16.msra.mxu0 0
        %988 = vmatprep.subr.bf16.mxu0 0
        %989 = vmatpush1.bf16.msra.mxu0 0
        %990 = vmatprep.subr.bf16.mxu0 0
        %991 = vmatpush1.bf16.msra.mxu0 0
        %992 = vmatprep.subr.bf16.mxu0 0
        %993 = vmatpush1.bf16.msra.mxu0 0
        %994 = vmatprep.subr.bf16.mxu0 0
        %995 = vmatpush1.bf16.msra.mxu0 0
        %996 = vmatprep.subr.bf16.mxu0 0
        %997 = vmatpush1.bf16.msra.mxu0 0
        %998 = vmatprep.mubr.bf16.mxu0 0
        %999 = vmatmul.mubr.bf16.gmra.mrb[0].mxu0 %v961
        %v1000 = vpop.f32.mrb[0].mxu0
        %v1001 = vadd.f32 0.0, %v1000
        %v1002 = vpop.f32.mrb[0].mxu0
        %v1003 = vpop.f32.mrb[0].mxu0
        %v1004 = vpop.f32.mrb[0].mxu0
        %1005 = vdwg.mxu0
        %v1007 = vsel %vm634, %v866, 0
        %v1010 = vsel %vm870, %v617, 0
        %1012 = vmatprep.subr.bf16.mxu0 0
        %1013 = vmatpush1.bf16.msra.mxu0 %v1010
        %1014 = vmatprep.subr.bf16.mxu0 0
        %1015 = vmatpush1.bf16.msra.mxu0 0
        %1016 = vmatprep.subr.bf16.mxu0 0
        %1017 = vmatpush1.bf16.msra.mxu0 0
        %1018 = vmatprep.subr.bf16.mxu0 0
        %1019 = vmatpush1.bf16.msra.mxu0 0
        %1020 = vmatprep.subr.bf16.mxu0 0
        %1021 = vmatpush1.bf16.msra.mxu0 0
        %1022 = vmatprep.subr.bf16.mxu0 0
        %1023 = vmatpush1.bf16.msra.mxu0 0
        %1024 = vmatprep.subr.bf16.mxu0 0
        %1025 = vmatpush1.bf16.msra.mxu0 0
        %1026 = vmatprep.subr.bf16.mxu0 0
        %1027 = vmatpush1.bf16.msra.mxu0 0
        %1028 = vmatprep.subr.bf16.mxu0 0
        %1029 = vmatpush1.bf16.msra.mxu0 0
        %1030 = vmatprep.subr.bf16.mxu0 0
        %1031 = vmatpush1.bf16.msra.mxu0 0
        %1032 = vmatprep.subr.bf16.mxu0 0
        %1033 = vmatpush1.bf16.msra.mxu0 0
        %1034 = vmatprep.subr.bf16.mxu0 0
        %1035 = vmatpush1.bf16.msra.mxu0 0
        %1036 = vmatprep.subr.bf16.mxu0 0
        %1037 = vmatpush1.bf16.msra.mxu0 0
        %1038 = vmatprep.subr.bf16.mxu0 0
        %1039 = vmatpush1.bf16.msra.mxu0 0
        %1040 = vmatprep.subr.bf16.mxu0 0
        %1041 = vmatpush1.bf16.msra.mxu0 0
        %1042 = vmatprep.subr.bf16.mxu0 0
        %1043 = vmatpush1.bf16.msra.mxu0 0
        %1044 = vmatprep.mubr.bf16.mxu0 0
        %1045 = vmatmul.mubr.bf16.gmra.mrb[0].mxu0 %v1007
        %v1046 = vpop.f32.mrb[0].mxu0
        %v1047 = vadd.f32 0.0, %v1046
        %v1048 = vpop.f32.mrb[0].mxu0
        %v1049 = vpop.f32.mrb[0].mxu0
        %v1050 = vpop.f32.mrb[0].mxu0
        %1051 = vdwg.mxu0
        %1053 = vrot.lane.b32.xlu0 %v955, 8
        %v1054 = vpop.permute.xlu0 %1053
        %1057 = vrot.lane.b32.xlu0 %v1001, 16
        %v1058 = vpop.permute.xlu0 %1057
        %1061 = vrot.lane.b32.xlu0 %v1047, 24
        %v1062 = vpop.permute.xlu0 %1061
        %v1064 = vsel %vm634, %v909, %v1054
        %v1065 = vsel %vm448, %v1064, %v1058
        %vm1066 = vcmask 195584
        %v1067 = vsel %vm1066, %v1065, %v1062
        %v1068 = vpack.c.bf16 %v1067, %v1067
        %v1069 = vld [vmem:[%s9] sm:$0xf]
        %v1070 = vld [vmem:[%s9 + $0x4] sm:$0xf]
        %v1071 = vld [vmem:[%s9 + $0x8] sm:$0xf]
        %v1072 = vld [vmem:[%s9 + $0xc] sm:$0xf]
        %v1073 = vld [vmem:[%s10] sm:$0x1]
        %v1075 = vlaneseq
        %v1076 = vshrl.u32 %v1075, 7
        %v1077 = vsub.s32 0, %v1076
        %v1078 = vrot.slane %v1073, %v1077
        %v1084 = vunpack.c.l.b16 %v1069
        %v1085 = vunpack.c.l.b16 %v1070
        %v1086 = vunpack.c.l.b16 %v1071
        %v1087 = vunpack.c.l.b16 %v1072
        %v1088 = vpack.c.b16 %v1085, %v1084
        %v1089 = vpack.c.b16 %v1087, %v1086
        %vm1092 = vcmask 261120
        %v1094 = vsel %vm1092, %v1068, 0
        %1096 = vmatprep.subr.bf16.mxu0 0
        %1097 = vmatpush1.bf16.msra.mxu0 %v1088
        %1098 = vmatprep.subr.bf16.mxu0 0
        %1099 = vmatpush1.bf16.msra.mxu0 %v1089
        %1100 = vmatprep.subr.bf16.mxu0 0
        %1101 = vmatpush1.bf16.msra.mxu0 0
        %1102 = vmatprep.subr.bf16.mxu0 0
        %1103 = vmatpush1.bf16.msra.mxu0 0
        %1104 = vmatprep.subr.bf16.mxu0 0
        %1105 = vmatpush1.bf16.msra.mxu0 0
        %1106 = vmatprep.subr.bf16.mxu0 0
        %1107 = vmatpush1.bf16.msra.mxu0 0
        %1108 = vmatprep.subr.bf16.mxu0 0
        %1109 = vmatpush1.bf16.msra.mxu0 0
        %1110 = vmatprep.subr.bf16.mxu0 0
        %1111 = vmatpush1.bf16.msra.mxu0 0
        %1112 = vmatprep.subr.bf16.mxu0 0
        %1113 = vmatpush1.bf16.msra.mxu0 0
        %1114 = vmatprep.subr.bf16.mxu0 0
        %1115 = vmatpush1.bf16.msra.mxu0 0
        %1116 = vmatprep.subr.bf16.mxu0 0
        %1117 = vmatpush1.bf16.msra.mxu0 0
        %1118 = vmatprep.subr.bf16.mxu0 0
        %1119 = vmatpush1.bf16.msra.mxu0 0
        %1120 = vmatprep.subr.bf16.mxu0 0
        %1121 = vmatpush1.bf16.msra.mxu0 0
        %1122 = vmatprep.subr.bf16.mxu0 0
        %1123 = vmatpush1.bf16.msra.mxu0 0
        %1124 = vmatprep.subr.bf16.mxu0 0
        %1125 = vmatpush1.bf16.msra.mxu0 0
        %1126 = vmatprep.subr.bf16.mxu0 0
        %1127 = vmatpush1.bf16.msra.mxu0 0
        %1128 = vmatprep.mubr.bf16.mxu0 0
        %1129 = vmatmul.mubr.bf16.gmra.mrb[0].mxu0 %v1094
        %v1130 = vpop.f32.mrb[0].mxu0
        %v1131 = vadd.f32 %v1078, %v1130
        %v1132 = vpop.f32.mrb[0].mxu0
        %v1133 = vpop.f32.mrb[0].mxu0
        %v1134 = vpop.f32.mrb[0].mxu0
        %1135 = vdwg.mxu0
        %1136 = vst.msk [vmem:[%s418] sm:$0xff] %vm448, %v1131
        %s1137 = sand.u32 %s280, 1
        %s1138 = scalar_lea.sflag [#allocation4], %s1137
        %s1139 = sand.u32 %s280, 1
        %s1140 = smul.addr %s1139, 8
        %s1141 = scalar_lea.vmem [#allocation5], %s1140
        // Predicated region
        $region69: #{tpu_custom_call.1} parent=63 // pred_check
          %p1142 = pneg %p290
        $region70: #{tpu_custom_call.1} parent=63 // pred_check_branch
          %1144 = sbr.rel (%p1142) target = $region72
        $region71: #{tpu_custom_call.1} parent=63 // pred_region
          %s1146 = ssub.s32 128, 128
          %1147 = vsyncadd %s1138, %s1146
          %s1148 = smul.addr %s26, 128
          %s1149 = scalar_lea.hbm %s11, %s1148
          %s1151 = sshll.u32 %s1141, 4
          %s1152 = int_to_ptr.vmem [resolvable:$true] %s1151
          %1154 = dma.vmem_to_hbm [thread:$0]  %s1152, 128, %s1149, %s1138
        $region72: #{tpu_custom_call.1} parent=63 // pred_fallthru
          _
      $region64: #{tpu_custom_call.1} parent=5 // pred_fallthru
        _
      %p1155 = scmp.le.s32.totalorder 2, %s21
      // Predicated region
      $region73: #{tpu_custom_call.1} parent=5 // pred_check
        %p1156 = pneg %p1155
      $region74: #{tpu_custom_call.1} parent=5 // pred_check_branch
        %1158 = sbr.rel (%p1156) target = $region76
      $region75: #{tpu_custom_call.1} parent=5 // pred_region
        %s1159 = ssub.s32 %s21, 2
        // Predicated region
        $region77: #{tpu_custom_call.1} parent=75 // pred_check
          %p1160 = pneg %p296
        $region78: #{tpu_custom_call.1} parent=75 // pred_check_branch
          %1162 = sbr.rel (%p1160) target = $region80
        $region79: #{tpu_custom_call.1} parent=75 // pred_region
          %s1163 = sand.u32 %s281, 1
          %s1164 = scalar_lea.sflag [#allocation4], %s1163
          %s1165 = sand.u32 %s281, 1
          %s1166 = smul.addr %s1165, 8
          %s1167 = scalar_lea.vmem [#allocation5], %s1166
          %1168 = dma.done %s1164, 128
        $region80: #{tpu_custom_call.1} parent=75 // pred_fallthru
          _
      $region76: #{tpu_custom_call.1} parent=5 // pred_fallthru
        _
    $region6: #{tpu_custom_call.1} parent=1 // loop_footer
      %s25 = sadd.s32 1, %s21
    $region7: #{tpu_custom_call.1} parent=1 // loop_footer_branch
      %20 = sbr.rel target = $region3
    $region8: #{tpu_custom_call.1} parent=1 // loop_exit
      _
    %1169 = vsyncpa [#allocation3], 1
    %s1170 = scalar_lea.sflag [#allocation3], 1
    %1171 = vsyncpa %s1170, 1
    %1172 = vsyncpa [#allocation4], 1
    %s1173 = scalar_lea.sflag [#allocation4], 1
    %1174 = vsyncpa %s1173, 1

</llo_original>
